<compile_context>
chip_gen: v7x
topology: tpu7x:2x2x1
jax: 0.10.0
libtpu: 0.0.40
codegen_flags: <defaults>
</compile_context>

<pallas_src>
import math

import jax
import jax.numpy as jnp
from jax.experimental import pallas as pl
from jax.experimental.pallas import tpu as pltpu

EMB = 16           # embedding_size
HID = 16           # hidden_size // 2 (per direction)
H2 = 2 * HID       # packed fwd+bwd width (= module hidden_size = 32)
VOCAB = 128        # nn.Embedding(128, embedding_size)


def bigru_kernel(tokf_ref, tokb_ref, wpf_ref, wpb_ref, whh_ref, bgi_ref, bgh_ref, out_ref):
    """Fused char-embedding + bidirectional GRU; writes final [h_fwd | h_bwd] of shape (B, 2*HID)."""
    SB = tokf_ref.shape[0]
    B, h2 = out_ref.shape                       # h2 == 2*HID == 32
    S = SB // B
    G = bgi_ref.shape[1]                        # 3 * h2 == 96 packed gate columns

    # ---- embedding gather + input projection for BOTH directions, hoisted out of the
    # recurrence as one-hot MXU matmuls over the whole sequence (128-deep contraction). ----
    iota = jax.lax.broadcasted_iota(jnp.int32, (SB, VOCAB), 1)
    oh_f = (tokf_ref[...] == iota).astype(jnp.float32)        # (SB, 128) forward time order
    oh_b = (tokb_ref[...] == iota).astype(jnp.float32)        # (SB, 128) reversed time order
    gi = (jnp.dot(oh_f, wpf_ref[...], preferred_element_type=jnp.float32)
          + jnp.dot(oh_b, wpb_ref[...], preferred_element_type=jnp.float32)
          + bgi_ref[...])                                     # (SB, 96), biases folded in

    # ---- hoisted weight/bias loads & broadcasts (not re-emitted per step) ----
    whh = whh_ref[...]                                        # (32, 96) block-diag recurrent weight
    bgh = jnp.broadcast_to(bgh_ref[...], (B, G))              # (B, 96); nonzero only on n columns

    h = jnp.zeros((B, h2), jnp.float32)                       # packed [h_fwd | h_bwd]

    # ---- merged fwd+bwd recurrence, statically unrolled (S is small & static) ----
    for i in range(S):
        gi_i = gi[i * B:(i + 1) * B, :]                       # fwd gates @ t=i, bwd gates @ t=S-1-i
        gh = jnp.dot(h, whh, preferred_element_type=jnp.float32) + bgh   # (B, 96)
        r = jax.nn.sigmoid(gi_i[:, 0:h2] + gh[:, 0:h2])                  # [r_f | r_b]
        z = jax.nn.sigmoid(gi_i[:, h2:2 * h2] + gh[:, h2:2 * h2])        # [z_f | z_b]
        n = jnp.tanh(gi_i[:, 2 * h2:3 * h2] + r * gh[:, 2 * h2:3 * h2])  # [n_f | n_b]
        h = (1.0 - z) * n + z * h

    out_ref[...] = h          # == h_n[-2:, :, :].transpose(0, 1).reshape(B, -1)


def _pack_weights(params):
    """Fold embedding into the input projection and pack both directions gate-major.

    Packed gate column order (96 lanes): [r_f r_b | z_f z_b | n_f n_b], 16 lanes each.
    """
    emb = params["char_embedding"]                                   # (128, EMB)
    wif = jnp.dot(emb, params["wih_f"])                              # (128, 48) cols [r, z, n]
    wib = jnp.dot(emb, params["wih_b"])                              # (128, 48)
    zv = jnp.zeros((VOCAB, HID), jnp.float32)
    wpf = jnp.concatenate(
        [wif[:, 0:HID], zv, wif[:, HID:2 * HID], zv, wif[:, 2 * HID:], zv], axis=1)   # (128, 96)
    wpb = jnp.concatenate(
        [zv, wib[:, 0:HID], zv, wib[:, HID:2 * HID], zv, wib[:, 2 * HID:]], axis=1)   # (128, 96)

    whh_f, whh_b = params["whh_f"], params["whh_b"]                  # (HID, 48)
    zh = jnp.zeros((HID, HID), jnp.float32)
    top = jnp.concatenate(
        [whh_f[:, 0:HID], zh, whh_f[:, HID:2 * HID], zh, whh_f[:, 2 * HID:], zh], axis=1)
    bot = jnp.concatenate(
        [zh, whh_b[:, 0:HID], zh, whh_b[:, HID:2 * HID], zh, whh_b[:, 2 * HID:]], axis=1)
    whh = jnp.concatenate([top, bot], axis=0)                        # (32, 96) block-diagonal

    bif, bib = params["bih_f"], params["bih_b"]                      # (1, 48)
    bhf, bhb = params["bhh_f"], params["bhh_b"]                      # (1, 48)
    # r/z biases pre-summed (b_i + b_h); n keeps b_in in bgi and b_hn in bgh (PyTorch GRU semantics).
    bgi = jnp.concatenate(
        [bif[:, 0:HID] + bhf[:, 0:HID], bib[:, 0:HID] + bhb[:, 0:HID],
         bif[:, HID:2 * HID] + bhf[:, HID:2 * HID], bib[:, HID:2 * HID] + bhb[:, HID:2 * HID],
         bif[:, 2 * HID:], bib[:, 2 * HID:]], axis=1)                # (1, 96)
    bgh = jnp.concatenate(
        [jnp.zeros((1, 2 * H2), jnp.float32), bhf[:, 2 * HID:], bhb[:, 2 * HID:]], axis=1)  # (1, 96)
    return wpf, wpb, whh, bgi, bgh


@jax.jit
def rnn_observation_embedding(tokens, params):
    """tokens: (batch, seq) int32 ASCII codes -> (batch, 2*HID) float32."""
    B, S = tokens.shape
    # Tiny pure-weight prep; fused into the same executable by jit (cache it once in real use).
    wpf, wpb, whh, bgi, bgh = _pack_weights(params)
    tok_tm = tokens.T.astype(jnp.int32)                 # time-major (S, B)
    tok_f = tok_tm.reshape(S * B, 1)                    # forward time order
    tok_b = tok_tm[::-1].reshape(S * B, 1)              # reversed time order (backward direction)

    vmem = pl.BlockSpec(memory_space=pltpu.MemorySpace.VMEM)
    # TODO(synk): if batch grows beyond toy size, add grid=(B//tb,) with
    # dimension_semantics=("parallel",) to use both TensorCores on v7x.
    return pl.pallas_call(
        bigru_kernel,
        out_shape=jax.ShapeDtypeStruct((B, H2), jnp.float32),
        in_specs=[vmem] * 7,
        out_specs=vmem,
    )(tok_f, tok_b, wpf, wpb, whh, bgi, bgh)


def _reference(tokens, params):
    """Plain-JAX reference with the naive (unpacked) formulation."""
    x = params["char_embedding"][tokens.T]              # (S, B, EMB)
    S, B, _ = x.shape

    def cell(x_t, h, wih, whh, bih, bhh):
        gi = x_t @ wih + bih
        gh = h @ whh + bhh
        r = jax.nn.sigmoid(gi[:, :HID] + gh[:, :HID])
        z = jax.nn.sigmoid(gi[:, HID:2 * HID] + gh[:, HID:2 * HID])
        n = jnp.tanh(gi[:, 2 * HID:] + r * gh[:, 2 * HID:])
        return (1.0 - z) * n + z * h

    hf = jnp.zeros((B, HID), jnp.float32)
    hb = jnp.zeros((B, HID), jnp.float32)
    for t in range(S):
        hf = cell(x[t], hf, params["wih_f"], params["whh_f"], params["bih_f"], params["bhh_f"])
        hb = cell(x[S - 1 - t], hb, params["wih_b"], params["whh_b"], params["bih_b"], params["bhh_b"])
    return jnp.concatenate([hf, hb], axis=1)


def encode_batch(observations):
    """Encode strings as ASCII codes, right-padded with 0 -> (batch, max_len) int32."""
    max_len = max(len(s) for s in observations)
    rows = []
    for s in observations:
        codes = [ord(c) % VOCAB for c in s] + [0] * (max_len - len(s))
        rows.append(codes)
    return jnp.asarray(rows, dtype=jnp.int32)


def init_params(key):
    """Deterministic synthetic init (shapes from the module's __init__)."""
    ks = jax.random.split(key, 9)
    bound = 1.0 / math.sqrt(HID)
    u = lambda k, shape: jax.random.uniform(k, shape, jnp.float32, -bound, bound)
    return dict(
        char_embedding=jax.random.normal(ks[0], (VOCAB, EMB), jnp.float32),
        # forward direction (gate order r, z, n along last axis)
        wih_f=u(ks[1], (EMB, 3 * HID)),
        whh_f=u(ks[2], (HID, 3 * HID)),
        bih_f=u(ks[3], (1, 3 * HID)),
        bhh_f=u(ks[4], (1, 3 * HID)),
        # reverse direction
        wih_b=u(ks[5], (EMB, 3 * HID)),
        whh_b=u(ks[6], (HID, 3 * HID)),
        bih_b=u(ks[7], (1, 3 * HID)),
        bhh_b=u(ks[8], (1, 3 * HID)),
    )


if __name__ == "__main__":
    key = jax.random.PRNGKey(0)
    params = init_params(key)

    observations = ["go north", "look at "]            # batch=2, seq=8
    tokens = encode_batch(observations)                # (2, 8) int32

    out = rnn_observation_embedding(tokens, params)
    out = jax.block_until_ready(out)
    assert out.shape == (len(observations), H2), out.shape
    assert out.dtype == jnp.float32

    ref = _reference(tokens, params)
    err = float(jnp.max(jnp.abs(out - ref)))
    assert err < 1e-2, f"max |kernel - reference| = {err}"
    print("KERNEL_OK")
</pallas_src>

<mosaic_0001>
module attributes {stable_mosaic.version = 11 : i64} {
  func.func @bigru_kernel(%arg0: memref<16x1xi32, #tpu.memory_space<vmem>>, %arg1: memref<16x1xi32, #tpu.memory_space<vmem>>, %arg2: memref<128x96xf32, #tpu.memory_space<vmem>>, %arg3: memref<128x96xf32, #tpu.memory_space<vmem>>, %arg4: memref<32x96xf32, #tpu.memory_space<vmem>>, %arg5: memref<1x96xf32, #tpu.memory_space<vmem>>, %arg6: memref<1x96xf32, #tpu.memory_space<vmem>>, %arg7: memref<2x32xf32, #tpu.memory_space<vmem>>) attributes {dimension_semantics = [], scalar_prefetch = 0 : i64, scratch_operands = 0 : i64, tpu.core_type = #tpu.core_type<tc>} {
    %0 = tpu.iota {dimensions = array<i32: 1>} : vector<16x128xi32>
    %c0 = arith.constant 0 : index
    %c0_0 = arith.constant 0 : index
    %1 = vector.load %arg0[%c0, %c0_0] : memref<16x1xi32, #tpu.memory_space<vmem>>, vector<16x1xi32>
    %2 = vector.broadcast %1 : vector<16x1xi32> to vector<16x128xi32>
    %3 = arith.cmpi eq, %2, %0 : vector<16x128xi32>
    %4 = arith.extui %3 : vector<16x128xi1> to vector<16x128xi32>
    %5 = arith.sitofp %4 : vector<16x128xi32> to vector<16x128xf32>
    %c0_1 = arith.constant 0 : index
    %c0_2 = arith.constant 0 : index
    %6 = vector.load %arg1[%c0_1, %c0_2] : memref<16x1xi32, #tpu.memory_space<vmem>>, vector<16x1xi32>
    %7 = vector.broadcast %6 : vector<16x1xi32> to vector<16x128xi32>
    %8 = arith.cmpi eq, %7, %0 : vector<16x128xi32>
    %9 = arith.extui %8 : vector<16x128xi1> to vector<16x128xi32>
    %10 = arith.sitofp %9 : vector<16x128xi32> to vector<16x128xf32>
    %c0_3 = arith.constant 0 : index
    %c0_4 = arith.constant 0 : index
    %11 = vector.load %arg2[%c0_3, %c0_4] : memref<128x96xf32, #tpu.memory_space<vmem>>, vector<128x96xf32>
    %cst = arith.constant dense<0.000000e+00> : vector<16x96xf32>
    %12 = tpu.matmul %5, %11, %cst {dimension_numbers = #tpu.dot_dimension_numbers<[1], [0], [0], [1], [0, 0, 1, 1], [], []>} : vector<16x128xf32>, vector<128x96xf32>, vector<16x96xf32> -> vector<16x96xf32>
    %c0_5 = arith.constant 0 : index
    %c0_6 = arith.constant 0 : index
    %13 = vector.load %arg3[%c0_5, %c0_6] : memref<128x96xf32, #tpu.memory_space<vmem>>, vector<128x96xf32>
    %cst_7 = arith.constant dense<0.000000e+00> : vector<16x96xf32>
    %14 = tpu.matmul %10, %13, %cst_7 {dimension_numbers = #tpu.dot_dimension_numbers<[1], [0], [0], [1], [0, 0, 1, 1], [], []>} : vector<16x128xf32>, vector<128x96xf32>, vector<16x96xf32> -> vector<16x96xf32>
    %15 = arith.addf %12, %14 : vector<16x96xf32>
    %c0_8 = arith.constant 0 : index
    %c0_9 = arith.constant 0 : index
    %16 = vector.load %arg5[%c0_8, %c0_9] : memref<1x96xf32, #tpu.memory_space<vmem>>, vector<1x96xf32>
    %17 = vector.broadcast %16 : vector<1x96xf32> to vector<16x96xf32>
    %18 = arith.addf %15, %17 : vector<16x96xf32>
    %c0_10 = arith.constant 0 : index
    %c0_11 = arith.constant 0 : index
    %19 = vector.load %arg4[%c0_10, %c0_11] : memref<32x96xf32, #tpu.memory_space<vmem>>, vector<32x96xf32>
    %c0_12 = arith.constant 0 : index
    %c0_13 = arith.constant 0 : index
    %20 = vector.load %arg6[%c0_12, %c0_13] : memref<1x96xf32, #tpu.memory_space<vmem>>, vector<1x96xf32>
    %21 = vector.shape_cast %20 : vector<1x96xf32> to vector<1x96xf32>
    %22 = vector.broadcast %21 : vector<1x96xf32> to vector<2x96xf32>
    %cst_14 = arith.constant 0.000000e+00 : f32
    %23 = vector.broadcast %cst_14 : f32 to vector<2x32xf32>
    %24 = vector.extract_strided_slice %18 {offsets = [0, 0], sizes = [2, 96], strides = [1, 1]} : vector<16x96xf32> to vector<2x96xf32>
    %cst_15 = arith.constant dense<0.000000e+00> : vector<2x96xf32>
    %25 = tpu.matmul %23, %19, %cst_15 {dimension_numbers = #tpu.dot_dimension_numbers<[1], [0], [0], [1], [0, 0, 1, 1], [], []>} : vector<2x32xf32>, vector<32x96xf32>, vector<2x96xf32> -> vector<2x96xf32>
    %26 = arith.addf %25, %22 : vector<2x96xf32>
    %27 = vector.extract_strided_slice %24 {offsets = [0, 0], sizes = [2, 32], strides = [1, 1]} : vector<2x96xf32> to vector<2x32xf32>
    %28 = vector.extract_strided_slice %26 {offsets = [0, 0], sizes = [2, 32], strides = [1, 1]} : vector<2x96xf32> to vector<2x32xf32>
    %29 = arith.addf %27, %28 : vector<2x32xf32>
    %30 = arith.negf %29 : vector<2x32xf32>
    %31 = math.exp %30 : vector<2x32xf32>
    %cst_16 = arith.constant 1.000000e+00 : f32
    %32 = vector.broadcast %cst_16 : f32 to vector<2x32xf32>
    %33 = arith.addf %32, %31 : vector<2x32xf32>
    %34 = arith.divf %32, %33 : vector<2x32xf32>
    %35 = vector.extract_strided_slice %24 {offsets = [0, 32], sizes = [2, 32], strides = [1, 1]} : vector<2x96xf32> to vector<2x32xf32>
    %36 = vector.extract_strided_slice %26 {offsets = [0, 32], sizes = [2, 32], strides = [1, 1]} : vector<2x96xf32> to vector<2x32xf32>
    %37 = arith.addf %35, %36 : vector<2x32xf32>
    %38 = arith.negf %37 : vector<2x32xf32>
    %39 = math.exp %38 : vector<2x32xf32>
    %cst_17 = arith.constant 1.000000e+00 : f32
    %40 = vector.broadcast %cst_17 : f32 to vector<2x32xf32>
    %41 = arith.addf %40, %39 : vector<2x32xf32>
    %42 = arith.divf %40, %41 : vector<2x32xf32>
    %43 = vector.extract_strided_slice %24 {offsets = [0, 64], sizes = [2, 32], strides = [1, 1]} : vector<2x96xf32> to vector<2x32xf32>
    %44 = vector.extract_strided_slice %26 {offsets = [0, 64], sizes = [2, 32], strides = [1, 1]} : vector<2x96xf32> to vector<2x32xf32>
    %45 = arith.mulf %34, %44 : vector<2x32xf32>
    %46 = arith.addf %43, %45 : vector<2x32xf32>
    %47 = math.tanh %46 : vector<2x32xf32>
    %cst_18 = arith.constant 1.000000e+00 : f32
    %48 = vector.broadcast %cst_18 : f32 to vector<2x32xf32>
    %49 = arith.subf %48, %42 : vector<2x32xf32>
    %50 = arith.mulf %49, %47 : vector<2x32xf32>
    %51 = arith.mulf %42, %23 : vector<2x32xf32>
    %52 = arith.addf %50, %51 : vector<2x32xf32>
    %53 = vector.extract_strided_slice %18 {offsets = [2, 0], sizes = [2, 96], strides = [1, 1]} : vector<16x96xf32> to vector<2x96xf32>
    %cst_19 = arith.constant dense<0.000000e+00> : vector<2x96xf32>
    %54 = tpu.matmul %52, %19, %cst_19 {dimension_numbers = #tpu.dot_dimension_numbers<[1], [0], [0], [1], [0, 0, 1, 1], [], []>} : vector<2x32xf32>, vector<32x96xf32>, vector<2x96xf32> -> vector<2x96xf32>
    %55 = arith.addf %54, %22 : vector<2x96xf32>
    %56 = vector.extract_strided_slice %53 {offsets = [0, 0], sizes = [2, 32], strides = [1, 1]} : vector<2x96xf32> to vector<2x32xf32>
    %57 = vector.extract_strided_slice %55 {offsets = [0, 0], sizes = [2, 32], strides = [1, 1]} : vector<2x96xf32> to vector<2x32xf32>
    %58 = arith.addf %56, %57 : vector<2x32xf32>
    %59 = arith.negf %58 : vector<2x32xf32>
    %60 = math.exp %59 : vector<2x32xf32>
    %cst_20 = arith.constant 1.000000e+00 : f32
    %61 = vector.broadcast %cst_20 : f32 to vector<2x32xf32>
    %62 = arith.addf %61, %60 : vector<2x32xf32>
    %63 = arith.divf %61, %62 : vector<2x32xf32>
    %64 = vector.extract_strided_slice %53 {offsets = [0, 32], sizes = [2, 32], strides = [1, 1]} : vector<2x96xf32> to vector<2x32xf32>
    %65 = vector.extract_strided_slice %55 {offsets = [0, 32], sizes = [2, 32], strides = [1, 1]} : vector<2x96xf32> to vector<2x32xf32>
    %66 = arith.addf %64, %65 : vector<2x32xf32>
    %67 = arith.negf %66 : vector<2x32xf32>
    %68 = math.exp %67 : vector<2x32xf32>
    %cst_21 = arith.constant 1.000000e+00 : f32
    %69 = vector.broadcast %cst_21 : f32 to vector<2x32xf32>
    %70 = arith.addf %69, %68 : vector<2x32xf32>
    %71 = arith.divf %69, %70 : vector<2x32xf32>
    %72 = vector.extract_strided_slice %53 {offsets = [0, 64], sizes = [2, 32], strides = [1, 1]} : vector<2x96xf32> to vector<2x32xf32>
    %73 = vector.extract_strided_slice %55 {offsets = [0, 64], sizes = [2, 32], strides = [1, 1]} : vector<2x96xf32> to vector<2x32xf32>
    %74 = arith.mulf %63, %73 : vector<2x32xf32>
    %75 = arith.addf %72, %74 : vector<2x32xf32>
    %76 = math.tanh %75 : vector<2x32xf32>
    %cst_22 = arith.constant 1.000000e+00 : f32
    %77 = vector.broadcast %cst_22 : f32 to vector<2x32xf32>
    %78 = arith.subf %77, %71 : vector<2x32xf32>
    %79 = arith.mulf %78, %76 : vector<2x32xf32>
    %80 = arith.mulf %71, %52 : vector<2x32xf32>
    %81 = arith.addf %79, %80 : vector<2x32xf32>
    %82 = vector.extract_strided_slice %18 {offsets = [4, 0], sizes = [2, 96], strides = [1, 1]} : vector<16x96xf32> to vector<2x96xf32>
    %cst_23 = arith.constant dense<0.000000e+00> : vector<2x96xf32>
    %83 = tpu.matmul %81, %19, %cst_23 {dimension_numbers = #tpu.dot_dimension_numbers<[1], [0], [0], [1], [0, 0, 1, 1], [], []>} : vector<2x32xf32>, vector<32x96xf32>, vector<2x96xf32> -> vector<2x96xf32>
    %84 = arith.addf %83, %22 : vector<2x96xf32>
    %85 = vector.extract_strided_slice %82 {offsets = [0, 0], sizes = [2, 32], strides = [1, 1]} : vector<2x96xf32> to vector<2x32xf32>
    %86 = vector.extract_strided_slice %84 {offsets = [0, 0], sizes = [2, 32], strides = [1, 1]} : vector<2x96xf32> to vector<2x32xf32>
    %87 = arith.addf %85, %86 : vector<2x32xf32>
    %88 = arith.negf %87 : vector<2x32xf32>
    %89 = math.exp %88 : vector<2x32xf32>
    %cst_24 = arith.constant 1.000000e+00 : f32
    %90 = vector.broadcast %cst_24 : f32 to vector<2x32xf32>
    %91 = arith.addf %90, %89 : vector<2x32xf32>
    %92 = arith.divf %90, %91 : vector<2x32xf32>
    %93 = vector.extract_strided_slice %82 {offsets = [0, 32], sizes = [2, 32], strides = [1, 1]} : vector<2x96xf32> to vector<2x32xf32>
    %94 = vector.extract_strided_slice %84 {offsets = [0, 32], sizes = [2, 32], strides = [1, 1]} : vector<2x96xf32> to vector<2x32xf32>
    %95 = arith.addf %93, %94 : vector<2x32xf32>
    %96 = arith.negf %95 : vector<2x32xf32>
    %97 = math.exp %96 : vector<2x32xf32>
    %cst_25 = arith.constant 1.000000e+00 : f32
    %98 = vector.broadcast %cst_25 : f32 to vector<2x32xf32>
    %99 = arith.addf %98, %97 : vector<2x32xf32>
    %100 = arith.divf %98, %99 : vector<2x32xf32>
    %101 = vector.extract_strided_slice %82 {offsets = [0, 64], sizes = [2, 32], strides = [1, 1]} : vector<2x96xf32> to vector<2x32xf32>
    %102 = vector.extract_strided_slice %84 {offsets = [0, 64], sizes = [2, 32], strides = [1, 1]} : vector<2x96xf32> to vector<2x32xf32>
    %103 = arith.mulf %92, %102 : vector<2x32xf32>
    %104 = arith.addf %101, %103 : vector<2x32xf32>
    %105 = math.tanh %104 : vector<2x32xf32>
    %cst_26 = arith.constant 1.000000e+00 : f32
    %106 = vector.broadcast %cst_26 : f32 to vector<2x32xf32>
    %107 = arith.subf %106, %100 : vector<2x32xf32>
    %108 = arith.mulf %107, %105 : vector<2x32xf32>
    %109 = arith.mulf %100, %81 : vector<2x32xf32>
    %110 = arith.addf %108, %109 : vector<2x32xf32>
    %111 = vector.extract_strided_slice %18 {offsets = [6, 0], sizes = [2, 96], strides = [1, 1]} : vector<16x96xf32> to vector<2x96xf32>
    %cst_27 = arith.constant dense<0.000000e+00> : vector<2x96xf32>
    %112 = tpu.matmul %110, %19, %cst_27 {dimension_numbers = #tpu.dot_dimension_numbers<[1], [0], [0], [1], [0, 0, 1, 1], [], []>} : vector<2x32xf32>, vector<32x96xf32>, vector<2x96xf32> -> vector<2x96xf32>
    %113 = arith.addf %112, %22 : vector<2x96xf32>
    %114 = vector.extract_strided_slice %111 {offsets = [0, 0], sizes = [2, 32], strides = [1, 1]} : vector<2x96xf32> to vector<2x32xf32>
    %115 = vector.extract_strided_slice %113 {offsets = [0, 0], sizes = [2, 32], strides = [1, 1]} : vector<2x96xf32> to vector<2x32xf32>
    %116 = arith.addf %114, %115 : vector<2x32xf32>
    %117 = arith.negf %116 : vector<2x32xf32>
    %118 = math.exp %117 : vector<2x32xf32>
    %cst_28 = arith.constant 1.000000e+00 : f32
    %119 = vector.broadcast %cst_28 : f32 to vector<2x32xf32>
    %120 = arith.addf %119, %118 : vector<2x32xf32>
    %121 = arith.divf %119, %120 : vector<2x32xf32>
    %122 = vector.extract_strided_slice %111 {offsets = [0, 32], sizes = [2, 32], strides = [1, 1]} : vector<2x96xf32> to vector<2x32xf32>
    %123 = vector.extract_strided_slice %113 {offsets = [0, 32], sizes = [2, 32], strides = [1, 1]} : vector<2x96xf32> to vector<2x32xf32>
    %124 = arith.addf %122, %123 : vector<2x32xf32>
    %125 = arith.negf %124 : vector<2x32xf32>
    %126 = math.exp %125 : vector<2x32xf32>
    %cst_29 = arith.constant 1.000000e+00 : f32
    %127 = vector.broadcast %cst_29 : f32 to vector<2x32xf32>
    %128 = arith.addf %127, %126 : vector<2x32xf32>
    %129 = arith.divf %127, %128 : vector<2x32xf32>
    %130 = vector.extract_strided_slice %111 {offsets = [0, 64], sizes = [2, 32], strides = [1, 1]} : vector<2x96xf32> to vector<2x32xf32>
    %131 = vector.extract_strided_slice %113 {offsets = [0, 64], sizes = [2, 32], strides = [1, 1]} : vector<2x96xf32> to vector<2x32xf32>
    %132 = arith.mulf %121, %131 : vector<2x32xf32>
    %133 = arith.addf %130, %132 : vector<2x32xf32>
    %134 = math.tanh %133 : vector<2x32xf32>
    %cst_30 = arith.constant 1.000000e+00 : f32
    %135 = vector.broadcast %cst_30 : f32 to vector<2x32xf32>
    %136 = arith.subf %135, %129 : vector<2x32xf32>
    %137 = arith.mulf %136, %134 : vector<2x32xf32>
    %138 = arith.mulf %129, %110 : vector<2x32xf32>
    %139 = arith.addf %137, %138 : vector<2x32xf32>
    %140 = vector.extract_strided_slice %18 {offsets = [8, 0], sizes = [2, 96], strides = [1, 1]} : vector<16x96xf32> to vector<2x96xf32>
    %cst_31 = arith.constant dense<0.000000e+00> : vector<2x96xf32>
    %141 = tpu.matmul %139, %19, %cst_31 {dimension_numbers = #tpu.dot_dimension_numbers<[1], [0], [0], [1], [0, 0, 1, 1], [], []>} : vector<2x32xf32>, vector<32x96xf32>, vector<2x96xf32> -> vector<2x96xf32>
    %142 = arith.addf %141, %22 : vector<2x96xf32>
    %143 = vector.extract_strided_slice %140 {offsets = [0, 0], sizes = [2, 32], strides = [1, 1]} : vector<2x96xf32> to vector<2x32xf32>
    %144 = vector.extract_strided_slice %142 {offsets = [0, 0], sizes = [2, 32], strides = [1, 1]} : vector<2x96xf32> to vector<2x32xf32>
    %145 = arith.addf %143, %144 : vector<2x32xf32>
    %146 = arith.negf %145 : vector<2x32xf32>
    %147 = math.exp %146 : vector<2x32xf32>
    %cst_32 = arith.constant 1.000000e+00 : f32
    %148 = vector.broadcast %cst_32 : f32 to vector<2x32xf32>
    %149 = arith.addf %148, %147 : vector<2x32xf32>
    %150 = arith.divf %148, %149 : vector<2x32xf32>
    %151 = vector.extract_strided_slice %140 {offsets = [0, 32], sizes = [2, 32], strides = [1, 1]} : vector<2x96xf32> to vector<2x32xf32>
    %152 = vector.extract_strided_slice %142 {offsets = [0, 32], sizes = [2, 32], strides = [1, 1]} : vector<2x96xf32> to vector<2x32xf32>
    %153 = arith.addf %151, %152 : vector<2x32xf32>
    %154 = arith.negf %153 : vector<2x32xf32>
    %155 = math.exp %154 : vector<2x32xf32>
    %cst_33 = arith.constant 1.000000e+00 : f32
    %156 = vector.broadcast %cst_33 : f32 to vector<2x32xf32>
    %157 = arith.addf %156, %155 : vector<2x32xf32>
    %158 = arith.divf %156, %157 : vector<2x32xf32>
    %159 = vector.extract_strided_slice %140 {offsets = [0, 64], sizes = [2, 32], strides = [1, 1]} : vector<2x96xf32> to vector<2x32xf32>
    %160 = vector.extract_strided_slice %142 {offsets = [0, 64], sizes = [2, 32], strides = [1, 1]} : vector<2x96xf32> to vector<2x32xf32>
    %161 = arith.mulf %150, %160 : vector<2x32xf32>
    %162 = arith.addf %159, %161 : vector<2x32xf32>
    %163 = math.tanh %162 : vector<2x32xf32>
    %cst_34 = arith.constant 1.000000e+00 : f32
    %164 = vector.broadcast %cst_34 : f32 to vector<2x32xf32>
    %165 = arith.subf %164, %158 : vector<2x32xf32>
    %166 = arith.mulf %165, %163 : vector<2x32xf32>
    %167 = arith.mulf %158, %139 : vector<2x32xf32>
    %168 = arith.addf %166, %167 : vector<2x32xf32>
    %169 = vector.extract_strided_slice %18 {offsets = [10, 0], sizes = [2, 96], strides = [1, 1]} : vector<16x96xf32> to vector<2x96xf32>
    %cst_35 = arith.constant dense<0.000000e+00> : vector<2x96xf32>
    %170 = tpu.matmul %168, %19, %cst_35 {dimension_numbers = #tpu.dot_dimension_numbers<[1], [0], [0], [1], [0, 0, 1, 1], [], []>} : vector<2x32xf32>, vector<32x96xf32>, vector<2x96xf32> -> vector<2x96xf32>
    %171 = arith.addf %170, %22 : vector<2x96xf32>
    %172 = vector.extract_strided_slice %169 {offsets = [0, 0], sizes = [2, 32], strides = [1, 1]} : vector<2x96xf32> to vector<2x32xf32>
    %173 = vector.extract_strided_slice %171 {offsets = [0, 0], sizes = [2, 32], strides = [1, 1]} : vector<2x96xf32> to vector<2x32xf32>
    %174 = arith.addf %172, %173 : vector<2x32xf32>
    %175 = arith.negf %174 : vector<2x32xf32>
    %176 = math.exp %175 : vector<2x32xf32>
    %cst_36 = arith.constant 1.000000e+00 : f32
    %177 = vector.broadcast %cst_36 : f32 to vector<2x32xf32>
    %178 = arith.addf %177, %176 : vector<2x32xf32>
    %179 = arith.divf %177, %178 : vector<2x32xf32>
    %180 = vector.extract_strided_slice %169 {offsets = [0, 32], sizes = [2, 32], strides = [1, 1]} : vector<2x96xf32> to vector<2x32xf32>
    %181 = vector.extract_strided_slice %171 {offsets = [0, 32], sizes = [2, 32], strides = [1, 1]} : vector<2x96xf32> to vector<2x32xf32>
    %182 = arith.addf %180, %181 : vector<2x32xf32>
    %183 = arith.negf %182 : vector<2x32xf32>
    %184 = math.exp %183 : vector<2x32xf32>
    %cst_37 = arith.constant 1.000000e+00 : f32
    %185 = vector.broadcast %cst_37 : f32 to vector<2x32xf32>
    %186 = arith.addf %185, %184 : vector<2x32xf32>
    %187 = arith.divf %185, %186 : vector<2x32xf32>
    %188 = vector.extract_strided_slice %169 {offsets = [0, 64], sizes = [2, 32], strides = [1, 1]} : vector<2x96xf32> to vector<2x32xf32>
    %189 = vector.extract_strided_slice %171 {offsets = [0, 64], sizes = [2, 32], strides = [1, 1]} : vector<2x96xf32> to vector<2x32xf32>
    %190 = arith.mulf %179, %189 : vector<2x32xf32>
    %191 = arith.addf %188, %190 : vector<2x32xf32>
    %192 = math.tanh %191 : vector<2x32xf32>
    %cst_38 = arith.constant 1.000000e+00 : f32
    %193 = vector.broadcast %cst_38 : f32 to vector<2x32xf32>
    %194 = arith.subf %193, %187 : vector<2x32xf32>
    %195 = arith.mulf %194, %192 : vector<2x32xf32>
    %196 = arith.mulf %187, %168 : vector<2x32xf32>
    %197 = arith.addf %195, %196 : vector<2x32xf32>
    %198 = vector.extract_strided_slice %18 {offsets = [12, 0], sizes = [2, 96], strides = [1, 1]} : vector<16x96xf32> to vector<2x96xf32>
    %cst_39 = arith.constant dense<0.000000e+00> : vector<2x96xf32>
    %199 = tpu.matmul %197, %19, %cst_39 {dimension_numbers = #tpu.dot_dimension_numbers<[1], [0], [0], [1], [0, 0, 1, 1], [], []>} : vector<2x32xf32>, vector<32x96xf32>, vector<2x96xf32> -> vector<2x96xf32>
    %200 = arith.addf %199, %22 : vector<2x96xf32>
    %201 = vector.extract_strided_slice %198 {offsets = [0, 0], sizes = [2, 32], strides = [1, 1]} : vector<2x96xf32> to vector<2x32xf32>
    %202 = vector.extract_strided_slice %200 {offsets = [0, 0], sizes = [2, 32], strides = [1, 1]} : vector<2x96xf32> to vector<2x32xf32>
    %203 = arith.addf %201, %202 : vector<2x32xf32>
    %204 = arith.negf %203 : vector<2x32xf32>
    %205 = math.exp %204 : vector<2x32xf32>
    %cst_40 = arith.constant 1.000000e+00 : f32
    %206 = vector.broadcast %cst_40 : f32 to vector<2x32xf32>
    %207 = arith.addf %206, %205 : vector<2x32xf32>
    %208 = arith.divf %206, %207 : vector<2x32xf32>
    %209 = vector.extract_strided_slice %198 {offsets = [0, 32], sizes = [2, 32], strides = [1, 1]} : vector<2x96xf32> to vector<2x32xf32>
    %210 = vector.extract_strided_slice %200 {offsets = [0, 32], sizes = [2, 32], strides = [1, 1]} : vector<2x96xf32> to vector<2x32xf32>
    %211 = arith.addf %209, %210 : vector<2x32xf32>
    %212 = arith.negf %211 : vector<2x32xf32>
    %213 = math.exp %212 : vector<2x32xf32>
    %cst_41 = arith.constant 1.000000e+00 : f32
    %214 = vector.broadcast %cst_41 : f32 to vector<2x32xf32>
    %215 = arith.addf %214, %213 : vector<2x32xf32>
    %216 = arith.divf %214, %215 : vector<2x32xf32>
    %217 = vector.extract_strided_slice %198 {offsets = [0, 64], sizes = [2, 32], strides = [1, 1]} : vector<2x96xf32> to vector<2x32xf32>
    %218 = vector.extract_strided_slice %200 {offsets = [0, 64], sizes = [2, 32], strides = [1, 1]} : vector<2x96xf32> to vector<2x32xf32>
    %219 = arith.mulf %208, %218 : vector<2x32xf32>
    %220 = arith.addf %217, %219 : vector<2x32xf32>
    %221 = math.tanh %220 : vector<2x32xf32>
    %cst_42 = arith.constant 1.000000e+00 : f32
    %222 = vector.broadcast %cst_42 : f32 to vector<2x32xf32>
    %223 = arith.subf %222, %216 : vector<2x32xf32>
    %224 = arith.mulf %223, %221 : vector<2x32xf32>
    %225 = arith.mulf %216, %197 : vector<2x32xf32>
    %226 = arith.addf %224, %225 : vector<2x32xf32>
    %227 = vector.extract_strided_slice %18 {offsets = [14, 0], sizes = [2, 96], strides = [1, 1]} : vector<16x96xf32> to vector<2x96xf32>
    %cst_43 = arith.constant dense<0.000000e+00> : vector<2x96xf32>
    %228 = tpu.matmul %226, %19, %cst_43 {dimension_numbers = #tpu.dot_dimension_numbers<[1], [0], [0], [1], [0, 0, 1, 1], [], []>} : vector<2x32xf32>, vector<32x96xf32>, vector<2x96xf32> -> vector<2x96xf32>
    %229 = arith.addf %228, %22 : vector<2x96xf32>
    %230 = vector.extract_strided_slice %227 {offsets = [0, 0], sizes = [2, 32], strides = [1, 1]} : vector<2x96xf32> to vector<2x32xf32>
    %231 = vector.extract_strided_slice %229 {offsets = [0, 0], sizes = [2, 32], strides = [1, 1]} : vector<2x96xf32> to vector<2x32xf32>
    %232 = arith.addf %230, %231 : vector<2x32xf32>
    %233 = arith.negf %232 : vector<2x32xf32>
    %234 = math.exp %233 : vector<2x32xf32>
    %cst_44 = arith.constant 1.000000e+00 : f32
    %235 = vector.broadcast %cst_44 : f32 to vector<2x32xf32>
    %236 = arith.addf %235, %234 : vector<2x32xf32>
    %237 = arith.divf %235, %236 : vector<2x32xf32>
    %238 = vector.extract_strided_slice %227 {offsets = [0, 32], sizes = [2, 32], strides = [1, 1]} : vector<2x96xf32> to vector<2x32xf32>
    %239 = vector.extract_strided_slice %229 {offsets = [0, 32], sizes = [2, 32], strides = [1, 1]} : vector<2x96xf32> to vector<2x32xf32>
    %240 = arith.addf %238, %239 : vector<2x32xf32>
    %241 = arith.negf %240 : vector<2x32xf32>
    %242 = math.exp %241 : vector<2x32xf32>
    %cst_45 = arith.constant 1.000000e+00 : f32
    %243 = vector.broadcast %cst_45 : f32 to vector<2x32xf32>
    %244 = arith.addf %243, %242 : vector<2x32xf32>
    %245 = arith.divf %243, %244 : vector<2x32xf32>
    %246 = vector.extract_strided_slice %227 {offsets = [0, 64], sizes = [2, 32], strides = [1, 1]} : vector<2x96xf32> to vector<2x32xf32>
    %247 = vector.extract_strided_slice %229 {offsets = [0, 64], sizes = [2, 32], strides = [1, 1]} : vector<2x96xf32> to vector<2x32xf32>
    %248 = arith.mulf %237, %247 : vector<2x32xf32>
    %249 = arith.addf %246, %248 : vector<2x32xf32>
    %250 = math.tanh %249 : vector<2x32xf32>
    %cst_46 = arith.constant 1.000000e+00 : f32
    %251 = vector.broadcast %cst_46 : f32 to vector<2x32xf32>
    %252 = arith.subf %251, %245 : vector<2x32xf32>
    %253 = arith.mulf %252, %250 : vector<2x32xf32>
    %254 = arith.mulf %245, %226 : vector<2x32xf32>
    %255 = arith.addf %253, %254 : vector<2x32xf32>
    %c0_47 = arith.constant 0 : index
    %c0_48 = arith.constant 0 : index
    %256 = vector.load %arg7[%c0_47, %c0_48] : memref<2x32xf32, #tpu.memory_space<vmem>>, vector<2x32xf32>
    tpu.vector_store %arg7[%c0_47, %c0_48], %255 {strides = array<i32>} : memref<2x32xf32, #tpu.memory_space<vmem>>, vector<2x32xf32>,
    return
  }
}

</mosaic_0001>

<llo_original>
// kernel: rnn_observation_embedding.1
$region0: #{rnn_observation_embedding.1}
  #allocation0 [shape = 'u32[]', space=smem, size = 0x4, offset = 0x4, fixed_abs, tag = 'smem constant byte address 0x4 - core index']
  #allocation1 [shape = 'u32[144,128]{1,0:T(1,128)}', space=vmem, size = 0x12000, scoped, tag = 'internal scratch']
  %s0 = inlined_call_operand.vmem [shape: s32[16,1], index: 0, kind: input, shape index: {}]
  %s1 = inlined_call_operand.vmem [shape: s32[16,1], index: 1, kind: input, shape index: {}]
  %s2 = inlined_call_operand.vmem [shape: f32[128,96], index: 2, kind: input, shape index: {}]
  %s3 = inlined_call_operand.vmem [shape: f32[128,96], index: 3, kind: input, shape index: {}]
  %s4 = inlined_call_operand.vmem [shape: f32[32,96], index: 4, kind: input, shape index: {}]
  %s5 = inlined_call_operand.vmem [shape: f32[1,96], index: 5, kind: input, shape index: {}]
  %s6 = inlined_call_operand.vmem [shape: f32[1,96], index: 6, kind: input, shape index: {}]
  %s7 = inlined_call_operand.hbm [shape: f32[2,32], index: 7, kind: output, shape index: {}]
  %s8 = sld [smem:[#allocation0]]
  $region38: #{rnn_observation_embedding.1} parent=0
    _
  %s10 = ssub.s32 1, %s8
  %s11 = scalar_select 0, %s10, %s8
  $region1: #{rnn_observation_embedding.1} parent=0
    #allocation2 [shape = 'u8[1024]{0}', space=vmem, size = 0x400, scoped, tag = 'output window, operand 0, single buffered']
    #allocation3 [shape = 's32[1]{0}', space=sflag, size = 0x4, scoped, tag = 'scoped memory for rnn_observation_embedding.1']
    %12 = vsyncpa [#allocation3], 0
    // Predicated region
    $region2: #{rnn_observation_embedding.1} parent=1 // pred_check
      _
    $region3: #{rnn_observation_embedding.1} parent=1 // pred_check_branch
      %14 = sbr.rel (0) target = $region5
    $region4: #{rnn_observation_embedding.1} parent=1 // pred_region
      _
    $region5: #{rnn_observation_embedding.1} parent=1 // pred_fallthru
      _
    // Predicated region
    $region6: #{rnn_observation_embedding.1} parent=1 // pred_check
      _
    $region7: #{rnn_observation_embedding.1} parent=1 // pred_check_branch
      %16 = sbr.rel (0) target = $region9
    $region8: #{rnn_observation_embedding.1} parent=1 // pred_region
      _
    $region9: #{rnn_observation_embedding.1} parent=1 // pred_fallthru
      _
    // Predicated region
    $region10: #{rnn_observation_embedding.1} parent=1 // pred_check
      _
    $region11: #{rnn_observation_embedding.1} parent=1 // pred_check_branch
      %18 = sbr.rel (0) target = $region13
    $region12: #{rnn_observation_embedding.1} parent=1 // pred_region
      _
    $region13: #{rnn_observation_embedding.1} parent=1 // pred_fallthru
      _
    // Predicated region
    $region14: #{rnn_observation_embedding.1} parent=1 // pred_check
      _
    $region15: #{rnn_observation_embedding.1} parent=1 // pred_check_branch
      %20 = sbr.rel (0) target = $region17
    $region16: #{rnn_observation_embedding.1} parent=1 // pred_region
      _
    $region17: #{rnn_observation_embedding.1} parent=1 // pred_fallthru
      _
    // Predicated region
    $region18: #{rnn_observation_embedding.1} parent=1 // pred_check
      _
    $region19: #{rnn_observation_embedding.1} parent=1 // pred_check_branch
      %22 = sbr.rel (0) target = $region21
    $region20: #{rnn_observation_embedding.1} parent=1 // pred_region
      _
    $region21: #{rnn_observation_embedding.1} parent=1 // pred_fallthru
      _
    // Predicated region
    $region22: #{rnn_observation_embedding.1} parent=1 // pred_check
      _
    $region23: #{rnn_observation_embedding.1} parent=1 // pred_check_branch
      %24 = sbr.rel (0) target = $region25
    $region24: #{rnn_observation_embedding.1} parent=1 // pred_region
      _
    $region25: #{rnn_observation_embedding.1} parent=1 // pred_fallthru
      _
    // Predicated region
    $region26: #{rnn_observation_embedding.1} parent=1 // pred_check
      _
    $region27: #{rnn_observation_embedding.1} parent=1 // pred_check_branch
      %26 = sbr.rel (0) target = $region29
    $region28: #{rnn_observation_embedding.1} parent=1 // pred_region
      _
    $region29: #{rnn_observation_embedding.1} parent=1 // pred_fallthru
      _
    %v27 = vlaneseq
    %v28 = vand.u32 %v27, 127
    %v29 = vld [vmem:[%s0] sm:$0xff]
    %v30 = vld [vmem:[%s0 + $0x8] sm:$0xff]
    %31 = vset.pattern.permute.xlu0 0
    %32 = vperm.xlu0 %31, %v29
    %v33 = vpop.permute.xlu0 %32
    %34 = vset.pattern.permute.xlu0 0
    %35 = vperm.xlu0 %34, %v30
    %v36 = vpop.permute.xlu0 %35
    %vm37 = vcmp.eq.s32.totalorder %v33, %v28
    %vm38 = vcmp.eq.s32.totalorder %v36, %v28
    %v39 = vsel %vm37, 1, 0
    %v40 = vsel %vm38, 1, 0
    %v41 = vcvt.s32.f32 %v39
    %v42 = vcvt.s32.f32 %v40
    %v43 = vld [vmem:[%s1] sm:$0xff]
    %v44 = vld [vmem:[%s1 + $0x8] sm:$0xff]
    %45 = vset.pattern.permute.xlu0 0
    %46 = vperm.xlu0 %45, %v43
    %v47 = vpop.permute.xlu0 %46
    %48 = vset.pattern.permute.xlu0 0
    %49 = vperm.xlu0 %48, %v44
    %v50 = vpop.permute.xlu0 %49
    %vm51 = vcmp.eq.s32.totalorder %v47, %v28
    %vm52 = vcmp.eq.s32.totalorder %v50, %v28
    %v53 = vsel %vm51, 1, 0
    %v54 = vsel %vm52, 1, 0
    %v55 = vcvt.s32.f32 %v53
    %v56 = vcvt.s32.f32 %v54
    %v57 = vld [vmem:[%s2] sm:$0xff]
    %v58 = vld [vmem:[%s2 + $0x8] sm:$0xff]
    %v59 = vld [vmem:[%s2 + $0x10] sm:$0xff]
    %v60 = vld [vmem:[%s2 + $0x18] sm:$0xff]
    %v61 = vld [vmem:[%s2 + $0x20] sm:$0xff]
    %v62 = vld [vmem:[%s2 + $0x28] sm:$0xff]
    %v63 = vld [vmem:[%s2 + $0x30] sm:$0xff]
    %v64 = vld [vmem:[%s2 + $0x38] sm:$0xff]
    %v65 = vld [vmem:[%s2 + $0x40] sm:$0xff]
    %v66 = vld [vmem:[%s2 + $0x48] sm:$0xff]
    %v67 = vld [vmem:[%s2 + $0x50] sm:$0xff]
    %v68 = vld [vmem:[%s2 + $0x58] sm:$0xff]
    %v69 = vld [vmem:[%s2 + $0x60] sm:$0xff]
    %v70 = vld [vmem:[%s2 + $0x68] sm:$0xff]
    %v71 = vld [vmem:[%s2 + $0x70] sm:$0xff]
    %v72 = vld [vmem:[%s2 + $0x78] sm:$0xff]
    %v73 = vld [vmem:[%s3] sm:$0xff]
    %v74 = vld [vmem:[%s3 + $0x8] sm:$0xff]
    %v75 = vld [vmem:[%s3 + $0x10] sm:$0xff]
    %v76 = vld [vmem:[%s3 + $0x18] sm:$0xff]
    %v77 = vld [vmem:[%s3 + $0x20] sm:$0xff]
    %v78 = vld [vmem:[%s3 + $0x28] sm:$0xff]
    %v79 = vld [vmem:[%s3 + $0x30] sm:$0xff]
    %v80 = vld [vmem:[%s3 + $0x38] sm:$0xff]
    %v81 = vld [vmem:[%s3 + $0x40] sm:$0xff]
    %v82 = vld [vmem:[%s3 + $0x48] sm:$0xff]
    %v83 = vld [vmem:[%s3 + $0x50] sm:$0xff]
    %v84 = vld [vmem:[%s3 + $0x58] sm:$0xff]
    %v85 = vld [vmem:[%s3 + $0x60] sm:$0xff]
    %v86 = vld [vmem:[%s3 + $0x68] sm:$0xff]
    %v87 = vld [vmem:[%s3 + $0x70] sm:$0xff]
    %v88 = vld [vmem:[%s3 + $0x78] sm:$0xff]
    %89 = vmatprep.subr.mxu0 0.0
    %90 = vmatpush1.msra.mxu0 %v73
    %91 = vmatprep.subr.mxu0 0.0
    %92 = vmatpush1.msra.mxu0 %v74
    %93 = vmatprep.subr.mxu0 0.0
    %94 = vmatpush1.msra.mxu0 %v75
    %95 = vmatprep.subr.mxu0 0.0
    %96 = vmatpush1.msra.mxu0 %v76
    %97 = vmatprep.subr.mxu0 0.0
    %98 = vmatpush1.msra.mxu0 %v77
    %99 = vmatprep.subr.mxu0 0.0
    %100 = vmatpush1.msra.mxu0 %v78
    %101 = vmatprep.subr.mxu0 0.0
    %102 = vmatpush1.msra.mxu0 %v79
    %103 = vmatprep.subr.mxu0 0.0
    %104 = vmatpush1.msra.mxu0 %v80
    %105 = vmatprep.subr.mxu0 0.0
    %106 = vmatpush1.msra.mxu0 %v81
    %107 = vmatprep.subr.mxu0 0.0
    %108 = vmatpush1.msra.mxu0 %v82
    %109 = vmatprep.subr.mxu0 0.0
    %110 = vmatpush1.msra.mxu0 %v83
    %111 = vmatprep.subr.mxu0 0.0
    %112 = vmatpush1.msra.mxu0 %v84
    %113 = vmatprep.subr.mxu0 0.0
    %114 = vmatpush1.msra.mxu0 %v85
    %115 = vmatprep.subr.mxu0 0.0
    %116 = vmatpush1.msra.mxu0 %v86
    %117 = vmatprep.subr.mxu0 0.0
    %118 = vmatpush1.msra.mxu0 %v87
    %119 = vmatprep.subr.mxu0 0.0
    %120 = vmatpush1.msra.mxu0 %v88
    %121 = vmatprep.subr.mxu0 0.0
    %122 = vmatpush1.msra.mxu0 0.0
    %123 = vmatprep.subr.mxu0 0.0
    %124 = vmatpush1.msra.mxu0 0.0
    %125 = vmatprep.subr.mxu0 0.0
    %126 = vmatpush1.msra.mxu0 0.0
    %127 = vmatprep.subr.mxu0 0.0
    %128 = vmatpush1.msra.mxu0 0.0
    %129 = vmatprep.subr.mxu0 0.0
    %130 = vmatpush1.msra.mxu0 0.0
    %131 = vmatprep.subr.mxu0 0.0
    %132 = vmatpush1.msra.mxu0 0.0
    %133 = vmatprep.subr.mxu0 0.0
    %134 = vmatpush1.msra.mxu0 0.0
    %135 = vmatprep.subr.mxu0 0.0
    %136 = vmatpush1.msra.mxu0 0.0
    %137 = vmatprep.subr.mxu0 0.0
    %138 = vmatpush1.msra.mxu0 0.0
    %139 = vmatprep.subr.mxu0 0.0
    %140 = vmatpush1.msra.mxu0 0.0
    %141 = vmatprep.subr.mxu0 0.0
    %142 = vmatpush1.msra.mxu0 0.0
    %143 = vmatprep.subr.mxu0 0.0
    %144 = vmatpush1.msra.mxu0 0.0
    %145 = vmatprep.subr.mxu0 0.0
    %146 = vmatpush1.msra.mxu0 0.0
    %147 = vmatprep.subr.mxu0 0.0
    %148 = vmatpush1.msra.mxu0 0.0
    %149 = vmatprep.subr.mxu0 0.0
    %150 = vmatpush1.msra.mxu0 0.0
    %151 = vmatprep.subr.mxu0 0.0
    %152 = vmatpush1.msra.mxu0 0.0
    %153 = vmatprep.mubr.f32.mxu0 0.0
    %154 = vmatmul.mubr.f32.gmra.mrb[0].mxu0 %v55
    %v155 = vpop.f32.mrb[0].mxu0
    %v156 = vadd.f32 0.0, %v155
    %v157 = vpop.f32.mrb[0].mxu0
    %158 = vmatprep.mubr.f32.mxu0 0.0
    %159 = vmatmul.mubr.f32.gmra.mrb[0].mxu0 %v56
    %v160 = vpop.f32.mrb[0].mxu0
    %v161 = vadd.f32 0.0, %v160
    %v162 = vpop.f32.mrb[0].mxu0
    %163 = vdwg.mxu0
    %164 = vmatprep.subr.mxu0 0.0
    %165 = vmatpush1.msra.mxu0 %v57
    %166 = vmatprep.subr.mxu0 0.0
    %167 = vmatpush1.msra.mxu0 %v58
    %168 = vmatprep.subr.mxu0 0.0
    %169 = vmatpush1.msra.mxu0 %v59
    %170 = vmatprep.subr.mxu0 0.0
    %171 = vmatpush1.msra.mxu0 %v60
    %172 = vmatprep.subr.mxu0 0.0
    %173 = vmatpush1.msra.mxu0 %v61
    %174 = vmatprep.subr.mxu0 0.0
    %175 = vmatpush1.msra.mxu0 %v62
    %176 = vmatprep.subr.mxu0 0.0
    %177 = vmatpush1.msra.mxu0 %v63
    %178 = vmatprep.subr.mxu0 0.0
    %179 = vmatpush1.msra.mxu0 %v64
    %180 = vmatprep.subr.mxu0 0.0
    %181 = vmatpush1.msra.mxu0 %v65
    %182 = vmatprep.subr.mxu0 0.0
    %183 = vmatpush1.msra.mxu0 %v66
    %184 = vmatprep.subr.mxu0 0.0
    %185 = vmatpush1.msra.mxu0 %v67
    %186 = vmatprep.subr.mxu0 0.0
    %187 = vmatpush1.msra.mxu0 %v68
    %188 = vmatprep.subr.mxu0 0.0
    %189 = vmatpush1.msra.mxu0 %v69
    %190 = vmatprep.subr.mxu0 0.0
    %191 = vmatpush1.msra.mxu0 %v70
    %192 = vmatprep.subr.mxu0 0.0
    %193 = vmatpush1.msra.mxu0 %v71
    %194 = vmatprep.subr.mxu0 0.0
    %195 = vmatpush1.msra.mxu0 %v72
    %196 = vmatprep.subr.mxu0 0.0
    %197 = vmatpush1.msra.mxu0 0.0
    %198 = vmatprep.subr.mxu0 0.0
    %199 = vmatpush1.msra.mxu0 0.0
    %200 = vmatprep.subr.mxu0 0.0
    %201 = vmatpush1.msra.mxu0 0.0
    %202 = vmatprep.subr.mxu0 0.0
    %203 = vmatpush1.msra.mxu0 0.0
    %204 = vmatprep.subr.mxu0 0.0
    %205 = vmatpush1.msra.mxu0 0.0
    %206 = vmatprep.subr.mxu0 0.0
    %207 = vmatpush1.msra.mxu0 0.0
    %208 = vmatprep.subr.mxu0 0.0
    %209 = vmatpush1.msra.mxu0 0.0
    %210 = vmatprep.subr.mxu0 0.0
    %211 = vmatpush1.msra.mxu0 0.0
    %212 = vmatprep.subr.mxu0 0.0
    %213 = vmatpush1.msra.mxu0 0.0
    %214 = vmatprep.subr.mxu0 0.0
    %215 = vmatpush1.msra.mxu0 0.0
    %216 = vmatprep.subr.mxu0 0.0
    %217 = vmatpush1.msra.mxu0 0.0
    %218 = vmatprep.subr.mxu0 0.0
    %219 = vmatpush1.msra.mxu0 0.0
    %220 = vmatprep.subr.mxu0 0.0
    %221 = vmatpush1.msra.mxu0 0.0
    %222 = vmatprep.subr.mxu0 0.0
    %223 = vmatpush1.msra.mxu0 0.0
    %224 = vmatprep.subr.mxu0 0.0
    %225 = vmatpush1.msra.mxu0 0.0
    %226 = vmatprep.subr.mxu0 0.0
    %227 = vmatpush1.msra.mxu0 0.0
    %228 = vmatprep.mubr.f32.mxu0 0.0
    %229 = vmatmul.mubr.f32.gmra.mrb[0].mxu0 %v41
    %v230 = vpop.f32.mrb[0].mxu0
    %v231 = vadd.f32 %v156, %v230
    %v232 = vpop.f32.mrb[0].mxu0
    %233 = vmatprep.mubr.f32.mxu0 0.0
    %234 = vmatmul.mubr.f32.gmra.mrb[0].mxu0 %v42
    %v235 = vpop.f32.mrb[0].mxu0
    %v236 = vadd.f32 %v161, %v235
    %v237 = vpop.f32.mrb[0].mxu0
    %238 = vdwg.mxu0
    %v239 = vld [vmem:[%s5] sm:$0x1]
    %v241 = vlaneseq
    %v242 = vshrl.u32 %v241, 7
    %v243 = vsub.s32 0, %v242
    %v244 = vrot.slane %v239, %v243
    %v246 = vadd.f32 %v231, %v244
    %v247 = vadd.f32 %v236, %v244
    %v248 = vld [vmem:[%s4] sm:$0xff]
    %v249 = vld [vmem:[%s4 + $0x8] sm:$0xff]
    %v250 = vld [vmem:[%s4 + $0x10] sm:$0xff]
    %v251 = vld [vmem:[%s4 + $0x18] sm:$0xff]
    %v252 = vld [vmem:[%s6] sm:$0x1]
    %v254 = vlaneseq
    %v255 = vshrl.u32 %v254, 7
    %v256 = vsub.s32 0, %v255
    %v257 = vrot.slane %v252, %v256
    %vm259 = vcmask 261120
    %v261 = vsel %vm259, 0.0, 0
    %263 = vmatprep.subr.mxu0 0.0
    %264 = vmatpush1.msra.mxu0 %v248
    %265 = vmatprep.subr.mxu0 0.0
    %266 = vmatpush1.msra.mxu0 %v249
    %267 = vmatprep.subr.mxu0 0.0
    %268 = vmatpush1.msra.mxu0 %v250
    %269 = vmatprep.subr.mxu0 0.0
    %270 = vmatpush1.msra.mxu0 %v251
    %271 = vmatprep.subr.mxu0 0.0
    %272 = vmatpush1.msra.mxu0 0.0
    %273 = vmatprep.subr.mxu0 0.0
    %274 = vmatpush1.msra.mxu0 0.0
    %275 = vmatprep.subr.mxu0 0.0
    %276 = vmatpush1.msra.mxu0 0.0
    %277 = vmatprep.subr.mxu0 0.0
    %278 = vmatpush1.msra.mxu0 0.0
    %279 = vmatprep.subr.mxu0 0.0
    %280 = vmatpush1.msra.mxu0 0.0
    %281 = vmatprep.subr.mxu0 0.0
    %282 = vmatpush1.msra.mxu0 0.0
    %283 = vmatprep.subr.mxu0 0.0
    %284 = vmatpush1.msra.mxu0 0.0
    %285 = vmatprep.subr.mxu0 0.0
    %286 = vmatpush1.msra.mxu0 0.0
    %287 = vmatprep.subr.mxu0 0.0
    %288 = vmatpush1.msra.mxu0 0.0
    %289 = vmatprep.subr.mxu0 0.0
    %290 = vmatpush1.msra.mxu0 0.0
    %291 = vmatprep.subr.mxu0 0.0
    %292 = vmatpush1.msra.mxu0 0.0
    %293 = vmatprep.subr.mxu0 0.0
    %294 = vmatpush1.msra.mxu0 0.0
    %295 = vmatprep.subr.mxu0 0.0
    %296 = vmatpush1.msra.mxu0 0.0
    %297 = vmatprep.subr.mxu0 0.0
    %298 = vmatpush1.msra.mxu0 0.0
    %299 = vmatprep.subr.mxu0 0.0
    %300 = vmatpush1.msra.mxu0 0.0
    %301 = vmatprep.subr.mxu0 0.0
    %302 = vmatpush1.msra.mxu0 0.0
    %303 = vmatprep.subr.mxu0 0.0
    %304 = vmatpush1.msra.mxu0 0.0
    %305 = vmatprep.subr.mxu0 0.0
    %306 = vmatpush1.msra.mxu0 0.0
    %307 = vmatprep.subr.mxu0 0.0
    %308 = vmatpush1.msra.mxu0 0.0
    %309 = vmatprep.subr.mxu0 0.0
    %310 = vmatpush1.msra.mxu0 0.0
    %311 = vmatprep.subr.mxu0 0.0
    %312 = vmatpush1.msra.mxu0 0.0
    %313 = vmatprep.subr.mxu0 0.0
    %314 = vmatpush1.msra.mxu0 0.0
    %315 = vmatprep.subr.mxu0 0.0
    %316 = vmatpush1.msra.mxu0 0.0
    %317 = vmatprep.subr.mxu0 0.0
    %318 = vmatpush1.msra.mxu0 0.0
    %319 = vmatprep.subr.mxu0 0.0
    %320 = vmatpush1.msra.mxu0 0.0
    %321 = vmatprep.subr.mxu0 0.0
    %322 = vmatpush1.msra.mxu0 0.0
    %323 = vmatprep.subr.mxu0 0.0
    %324 = vmatpush1.msra.mxu0 0.0
    %325 = vmatprep.subr.mxu0 0.0
    %326 = vmatpush1.msra.mxu0 0.0
    %327 = vmatprep.mubr.f32.mxu0 0.0
    %328 = vmatmul.mubr.f32.gmra.mrb[0].mxu0 %v261
    %v329 = vpop.f32.mrb[0].mxu0
    %v330 = vadd.f32 %v257, %v329
    %v331 = vpop.f32.mrb[0].mxu0
    %332 = vdwg.mxu0
    %v333 = vadd.f32 %v246, %v330
    %v334 = vxor.u32 %v333, 2147483648
    %v335 = vmul.f32 %v334, 1.442695
    %v336 = vpow.pop %v335
    %v337 = vadd.f32 %v336, 1.0
    %v338 = vrcp.pop %v337
    %v339 = vmul.f32 1.0, %v338
    %341 = vrot.lane.b32.xlu0 %v330, 64
    %v342 = vpop.permute.xlu0 %341
    %v344 = vmul.f32 %v339, %v342
    %346 = vrot.lane.b32.xlu0 %v344, 64
    %v347 = vpop.permute.xlu0 %346
    %v349 = vadd.f32 %v246, %v347
    %v350 = vtanh.pop %v349
    %v351 = vsub.f32 1.0, %v339
    %353 = vrot.lane.b32.xlu0 %v350, 96
    %v354 = vpop.permute.xlu0 %353
    %v356 = vmul.f32 %v351, %v354
    %v357 = vmul.f32 %v339, 0.0
    %v358 = vadd.f32 %v356, %v357
    %360 = vrot.lane.b32.xlu0 %v358, 96
    %v361 = vpop.permute.xlu0 %360
    %v362 = vsel %vm259, %v361, 0
    %364 = vmatprep.subr.mxu0 0.0
    %365 = vmatpush1.msra.mxu0 %v248
    %366 = vmatprep.subr.mxu0 0.0
    %367 = vmatpush1.msra.mxu0 %v249
    %368 = vmatprep.subr.mxu0 0.0
    %369 = vmatpush1.msra.mxu0 %v250
    %370 = vmatprep.subr.mxu0 0.0
    %371 = vmatpush1.msra.mxu0 %v251
    %372 = vmatprep.subr.mxu0 0.0
    %373 = vmatpush1.msra.mxu0 0.0
    %374 = vmatprep.subr.mxu0 0.0
    %375 = vmatpush1.msra.mxu0 0.0
    %376 = vmatprep.subr.mxu0 0.0
    %377 = vmatpush1.msra.mxu0 0.0
    %378 = vmatprep.subr.mxu0 0.0
    %379 = vmatpush1.msra.mxu0 0.0
    %380 = vmatprep.subr.mxu0 0.0
    %381 = vmatpush1.msra.mxu0 0.0
    %382 = vmatprep.subr.mxu0 0.0
    %383 = vmatpush1.msra.mxu0 0.0
    %384 = vmatprep.subr.mxu0 0.0
    %385 = vmatpush1.msra.mxu0 0.0
    %386 = vmatprep.subr.mxu0 0.0
    %387 = vmatpush1.msra.mxu0 0.0
    %388 = vmatprep.subr.mxu0 0.0
    %389 = vmatpush1.msra.mxu0 0.0
    %390 = vmatprep.subr.mxu0 0.0
    %391 = vmatpush1.msra.mxu0 0.0
    %392 = vmatprep.subr.mxu0 0.0
    %393 = vmatpush1.msra.mxu0 0.0
    %394 = vmatprep.subr.mxu0 0.0
    %395 = vmatpush1.msra.mxu0 0.0
    %396 = vmatprep.subr.mxu0 0.0
    %397 = vmatpush1.msra.mxu0 0.0
    %398 = vmatprep.subr.mxu0 0.0
    %399 = vmatpush1.msra.mxu0 0.0
    %400 = vmatprep.subr.mxu0 0.0
    %401 = vmatpush1.msra.mxu0 0.0
    %402 = vmatprep.subr.mxu0 0.0
    %403 = vmatpush1.msra.mxu0 0.0
    %404 = vmatprep.subr.mxu0 0.0
    %405 = vmatpush1.msra.mxu0 0.0
    %406 = vmatprep.subr.mxu0 0.0
    %407 = vmatpush1.msra.mxu0 0.0
    %408 = vmatprep.subr.mxu0 0.0
    %409 = vmatpush1.msra.mxu0 0.0
    %410 = vmatprep.subr.mxu0 0.0
    %411 = vmatpush1.msra.mxu0 0.0
    %412 = vmatprep.subr.mxu0 0.0
    %413 = vmatpush1.msra.mxu0 0.0
    %414 = vmatprep.subr.mxu0 0.0
    %415 = vmatpush1.msra.mxu0 0.0
    %416 = vmatprep.subr.mxu0 0.0
    %417 = vmatpush1.msra.mxu0 0.0
    %418 = vmatprep.subr.mxu0 0.0
    %419 = vmatpush1.msra.mxu0 0.0
    %420 = vmatprep.subr.mxu0 0.0
    %421 = vmatpush1.msra.mxu0 0.0
    %422 = vmatprep.subr.mxu0 0.0
    %423 = vmatpush1.msra.mxu0 0.0
    %424 = vmatprep.subr.mxu0 0.0
    %425 = vmatpush1.msra.mxu0 0.0
    %426 = vmatprep.subr.mxu0 0.0
    %427 = vmatpush1.msra.mxu0 0.0
    %428 = vmatprep.mubr.f32.mxu0 0.0
    %429 = vmatmul.mubr.f32.gmra.mrb[0].mxu0 %v362
    %v430 = vpop.f32.mrb[0].mxu0
    %v431 = vadd.f32 %v257, %v430
    %v432 = vpop.f32.mrb[0].mxu0
    %433 = vdwg.mxu0
    %v435 = vrot.slane %v431, 6
    %v437 = vadd.f32 %v246, %v435
    %v438 = vxor.u32 %v437, 2147483648
    %v439 = vmul.f32 %v438, 1.442695
    %v440 = vpow.pop %v439
    %v441 = vadd.f32 %v440, 1.0
    %v442 = vrcp.pop %v441
    %v443 = vmul.f32 1.0, %v442
    %444 = vrot.lane.b32.xlu0 %v435, 64
    %v445 = vpop.permute.xlu0 %444
    %v447 = vmul.f32 %v443, %v445
    %449 = vrot.lane.b32.xlu0 %v447, 64
    %v450 = vpop.permute.xlu0 %449
    %v452 = vadd.f32 %v246, %v450
    %v453 = vtanh.pop %v452
    %v454 = vsub.f32 1.0, %v443
    %456 = vrot.lane.b32.xlu0 %v453, 96
    %v457 = vpop.permute.xlu0 %456
    %v459 = vmul.f32 %v454, %v457
    %v460 = vrot.slane %v358, 6
    %v462 = vmul.f32 %v443, %v460
    %v463 = vadd.f32 %v459, %v462
    %v465 = vrot.slane %v463, 2
    %466 = vrot.lane.b32.xlu0 %v465, 96
    %v467 = vpop.permute.xlu0 %466
    %v468 = vsel %vm259, %v467, 0
    %470 = vmatprep.subr.mxu0 0.0
    %471 = vmatpush1.msra.mxu0 %v248
    %472 = vmatprep.subr.mxu0 0.0
    %473 = vmatpush1.msra.mxu0 %v249
    %474 = vmatprep.subr.mxu0 0.0
    %475 = vmatpush1.msra.mxu0 %v250
    %476 = vmatprep.subr.mxu0 0.0
    %477 = vmatpush1.msra.mxu0 %v251
    %478 = vmatprep.subr.mxu0 0.0
    %479 = vmatpush1.msra.mxu0 0.0
    %480 = vmatprep.subr.mxu0 0.0
    %481 = vmatpush1.msra.mxu0 0.0
    %482 = vmatprep.subr.mxu0 0.0
    %483 = vmatpush1.msra.mxu0 0.0
    %484 = vmatprep.subr.mxu0 0.0
    %485 = vmatpush1.msra.mxu0 0.0
    %486 = vmatprep.subr.mxu0 0.0
    %487 = vmatpush1.msra.mxu0 0.0
    %488 = vmatprep.subr.mxu0 0.0
    %489 = vmatpush1.msra.mxu0 0.0
    %490 = vmatprep.subr.mxu0 0.0
    %491 = vmatpush1.msra.mxu0 0.0
    %492 = vmatprep.subr.mxu0 0.0
    %493 = vmatpush1.msra.mxu0 0.0
    %494 = vmatprep.subr.mxu0 0.0
    %495 = vmatpush1.msra.mxu0 0.0
    %496 = vmatprep.subr.mxu0 0.0
    %497 = vmatpush1.msra.mxu0 0.0
    %498 = vmatprep.subr.mxu0 0.0
    %499 = vmatpush1.msra.mxu0 0.0
    %500 = vmatprep.subr.mxu0 0.0
    %501 = vmatpush1.msra.mxu0 0.0
    %502 = vmatprep.subr.mxu0 0.0
    %503 = vmatpush1.msra.mxu0 0.0
    %504 = vmatprep.subr.mxu0 0.0
    %505 = vmatpush1.msra.mxu0 0.0
    %506 = vmatprep.subr.mxu0 0.0
    %507 = vmatpush1.msra.mxu0 0.0
    %508 = vmatprep.subr.mxu0 0.0
    %509 = vmatpush1.msra.mxu0 0.0
    %510 = vmatprep.subr.mxu0 0.0
    %511 = vmatpush1.msra.mxu0 0.0
    %512 = vmatprep.subr.mxu0 0.0
    %513 = vmatpush1.msra.mxu0 0.0
    %514 = vmatprep.subr.mxu0 0.0
    %515 = vmatpush1.msra.mxu0 0.0
    %516 = vmatprep.subr.mxu0 0.0
    %517 = vmatpush1.msra.mxu0 0.0
    %518 = vmatprep.subr.mxu0 0.0
    %519 = vmatpush1.msra.mxu0 0.0
    %520 = vmatprep.subr.mxu0 0.0
    %521 = vmatpush1.msra.mxu0 0.0
    %522 = vmatprep.subr.mxu0 0.0
    %523 = vmatpush1.msra.mxu0 0.0
    %524 = vmatprep.subr.mxu0 0.0
    %525 = vmatpush1.msra.mxu0 0.0
    %526 = vmatprep.subr.mxu0 0.0
    %527 = vmatpush1.msra.mxu0 0.0
    %528 = vmatprep.subr.mxu0 0.0
    %529 = vmatpush1.msra.mxu0 0.0
    %530 = vmatprep.subr.mxu0 0.0
    %531 = vmatpush1.msra.mxu0 0.0
    %532 = vmatprep.subr.mxu0 0.0
    %533 = vmatpush1.msra.mxu0 0.0
    %534 = vmatprep.mubr.f32.mxu0 0.0
    %535 = vmatmul.mubr.f32.gmra.mrb[0].mxu0 %v468
    %v536 = vpop.f32.mrb[0].mxu0
    %v537 = vadd.f32 %v257, %v536
    %v538 = vpop.f32.mrb[0].mxu0
    %539 = vdwg.mxu0
    %v541 = vrot.slane %v537, 4
    %v543 = vadd.f32 %v246, %v541
    %v544 = vxor.u32 %v543, 2147483648
    %v545 = vmul.f32 %v544, 1.442695
    %v546 = vpow.pop %v545
    %v547 = vadd.f32 %v546, 1.0
    %v548 = vrcp.pop %v547
    %v549 = vmul.f32 1.0, %v548
    %550 = vrot.lane.b32.xlu0 %v541, 64
    %v551 = vpop.permute.xlu0 %550
    %v553 = vmul.f32 %v549, %v551
    %555 = vrot.lane.b32.xlu0 %v553, 64
    %v556 = vpop.permute.xlu0 %555
    %v558 = vadd.f32 %v246, %v556
    %v559 = vtanh.pop %v558
    %v560 = vsub.f32 1.0, %v549
    %562 = vrot.lane.b32.xlu0 %v559, 96
    %v563 = vpop.permute.xlu0 %562
    %v565 = vmul.f32 %v560, %v563
    %v566 = vrot.slane %v463, 6
    %v568 = vmul.f32 %v549, %v566
    %v569 = vadd.f32 %v565, %v568
    %v571 = vrot.slane %v569, 4
    %572 = vrot.lane.b32.xlu0 %v571, 96
    %v573 = vpop.permute.xlu0 %572
    %v574 = vsel %vm259, %v573, 0
    %576 = vmatprep.subr.mxu0 0.0
    %577 = vmatpush1.msra.mxu0 %v248
    %578 = vmatprep.subr.mxu0 0.0
    %579 = vmatpush1.msra.mxu0 %v249
    %580 = vmatprep.subr.mxu0 0.0
    %581 = vmatpush1.msra.mxu0 %v250
    %582 = vmatprep.subr.mxu0 0.0
    %583 = vmatpush1.msra.mxu0 %v251
    %584 = vmatprep.subr.mxu0 0.0
    %585 = vmatpush1.msra.mxu0 0.0
    %586 = vmatprep.subr.mxu0 0.0
    %587 = vmatpush1.msra.mxu0 0.0
    %588 = vmatprep.subr.mxu0 0.0
    %589 = vmatpush1.msra.mxu0 0.0
    %590 = vmatprep.subr.mxu0 0.0
    %591 = vmatpush1.msra.mxu0 0.0
    %592 = vmatprep.subr.mxu0 0.0
    %593 = vmatpush1.msra.mxu0 0.0
    %594 = vmatprep.subr.mxu0 0.0
    %595 = vmatpush1.msra.mxu0 0.0
    %596 = vmatprep.subr.mxu0 0.0
    %597 = vmatpush1.msra.mxu0 0.0
    %598 = vmatprep.subr.mxu0 0.0
    %599 = vmatpush1.msra.mxu0 0.0
    %600 = vmatprep.subr.mxu0 0.0
    %601 = vmatpush1.msra.mxu0 0.0
    %602 = vmatprep.subr.mxu0 0.0
    %603 = vmatpush1.msra.mxu0 0.0
    %604 = vmatprep.subr.mxu0 0.0
    %605 = vmatpush1.msra.mxu0 0.0
    %606 = vmatprep.subr.mxu0 0.0
    %607 = vmatpush1.msra.mxu0 0.0
    %608 = vmatprep.subr.mxu0 0.0
    %609 = vmatpush1.msra.mxu0 0.0
    %610 = vmatprep.subr.mxu0 0.0
    %611 = vmatpush1.msra.mxu0 0.0
    %612 = vmatprep.subr.mxu0 0.0
    %613 = vmatpush1.msra.mxu0 0.0
    %614 = vmatprep.subr.mxu0 0.0
    %615 = vmatpush1.msra.mxu0 0.0
    %616 = vmatprep.subr.mxu0 0.0
    %617 = vmatpush1.msra.mxu0 0.0
    %618 = vmatprep.subr.mxu0 0.0
    %619 = vmatpush1.msra.mxu0 0.0
    %620 = vmatprep.subr.mxu0 0.0
    %621 = vmatpush1.msra.mxu0 0.0
    %622 = vmatprep.subr.mxu0 0.0
    %623 = vmatpush1.msra.mxu0 0.0
    %624 = vmatprep.subr.mxu0 0.0
    %625 = vmatpush1.msra.mxu0 0.0
    %626 = vmatprep.subr.mxu0 0.0
    %627 = vmatpush1.msra.mxu0 0.0
    %628 = vmatprep.subr.mxu0 0.0
    %629 = vmatpush1.msra.mxu0 0.0
    %630 = vmatprep.subr.mxu0 0.0
    %631 = vmatpush1.msra.mxu0 0.0
    %632 = vmatprep.subr.mxu0 0.0
    %633 = vmatpush1.msra.mxu0 0.0
    %634 = vmatprep.subr.mxu0 0.0
    %635 = vmatpush1.msra.mxu0 0.0
    %636 = vmatprep.subr.mxu0 0.0
    %637 = vmatpush1.msra.mxu0 0.0
    %638 = vmatprep.subr.mxu0 0.0
    %639 = vmatpush1.msra.mxu0 0.0
    %640 = vmatprep.mubr.f32.mxu0 0.0
    %641 = vmatmul.mubr.f32.gmra.mrb[0].mxu0 %v574
    %v642 = vpop.f32.mrb[0].mxu0
    %v643 = vadd.f32 %v257, %v642
    %v644 = vpop.f32.mrb[0].mxu0
    %645 = vdwg.mxu0
    %v647 = vrot.slane %v643, 2
    %v649 = vadd.f32 %v246, %v647
    %v650 = vxor.u32 %v649, 2147483648
    %v651 = vmul.f32 %v650, 1.442695
    %v652 = vpow.pop %v651
    %v653 = vadd.f32 %v652, 1.0
    %v654 = vrcp.pop %v653
    %v655 = vmul.f32 1.0, %v654
    %656 = vrot.lane.b32.xlu0 %v647, 64
    %v657 = vpop.permute.xlu0 %656
    %v659 = vmul.f32 %v655, %v657
    %661 = vrot.lane.b32.xlu0 %v659, 64
    %v662 = vpop.permute.xlu0 %661
    %v664 = vadd.f32 %v246, %v662
    %v665 = vtanh.pop %v664
    %v666 = vsub.f32 1.0, %v655
    %668 = vrot.lane.b32.xlu0 %v665, 96
    %v669 = vpop.permute.xlu0 %668
    %v671 = vmul.f32 %v666, %v669
    %v672 = vrot.slane %v569, 6
    %v674 = vmul.f32 %v655, %v672
    %v675 = vadd.f32 %v671, %v674
    %v677 = vrot.slane %v675, 6
    %678 = vrot.lane.b32.xlu0 %v677, 96
    %v679 = vpop.permute.xlu0 %678
    %v680 = vsel %vm259, %v679, 0
    %682 = vmatprep.subr.mxu0 0.0
    %683 = vmatpush1.msra.mxu0 %v248
    %684 = vmatprep.subr.mxu0 0.0
    %685 = vmatpush1.msra.mxu0 %v249
    %686 = vmatprep.subr.mxu0 0.0
    %687 = vmatpush1.msra.mxu0 %v250
    %688 = vmatprep.subr.mxu0 0.0
    %689 = vmatpush1.msra.mxu0 %v251
    %690 = vmatprep.subr.mxu0 0.0
    %691 = vmatpush1.msra.mxu0 0.0
    %692 = vmatprep.subr.mxu0 0.0
    %693 = vmatpush1.msra.mxu0 0.0
    %694 = vmatprep.subr.mxu0 0.0
    %695 = vmatpush1.msra.mxu0 0.0
    %696 = vmatprep.subr.mxu0 0.0
    %697 = vmatpush1.msra.mxu0 0.0
    %698 = vmatprep.subr.mxu0 0.0
    %699 = vmatpush1.msra.mxu0 0.0
    %700 = vmatprep.subr.mxu0 0.0
    %701 = vmatpush1.msra.mxu0 0.0
    %702 = vmatprep.subr.mxu0 0.0
    %703 = vmatpush1.msra.mxu0 0.0
    %704 = vmatprep.subr.mxu0 0.0
    %705 = vmatpush1.msra.mxu0 0.0
    %706 = vmatprep.subr.mxu0 0.0
    %707 = vmatpush1.msra.mxu0 0.0
    %708 = vmatprep.subr.mxu0 0.0
    %709 = vmatpush1.msra.mxu0 0.0
    %710 = vmatprep.subr.mxu0 0.0
    %711 = vmatpush1.msra.mxu0 0.0
    %712 = vmatprep.subr.mxu0 0.0
    %713 = vmatpush1.msra.mxu0 0.0
    %714 = vmatprep.subr.mxu0 0.0
    %715 = vmatpush1.msra.mxu0 0.0
    %716 = vmatprep.subr.mxu0 0.0
    %717 = vmatpush1.msra.mxu0 0.0
    %718 = vmatprep.subr.mxu0 0.0
    %719 = vmatpush1.msra.mxu0 0.0
    %720 = vmatprep.subr.mxu0 0.0
    %721 = vmatpush1.msra.mxu0 0.0
    %722 = vmatprep.subr.mxu0 0.0
    %723 = vmatpush1.msra.mxu0 0.0
    %724 = vmatprep.subr.mxu0 0.0
    %725 = vmatpush1.msra.mxu0 0.0
    %726 = vmatprep.subr.mxu0 0.0
    %727 = vmatpush1.msra.mxu0 0.0
    %728 = vmatprep.subr.mxu0 0.0
    %729 = vmatpush1.msra.mxu0 0.0
    %730 = vmatprep.subr.mxu0 0.0
    %731 = vmatpush1.msra.mxu0 0.0
    %732 = vmatprep.subr.mxu0 0.0
    %733 = vmatpush1.msra.mxu0 0.0
    %734 = vmatprep.subr.mxu0 0.0
    %735 = vmatpush1.msra.mxu0 0.0
    %736 = vmatprep.subr.mxu0 0.0
    %737 = vmatpush1.msra.mxu0 0.0
    %738 = vmatprep.subr.mxu0 0.0
    %739 = vmatpush1.msra.mxu0 0.0
    %740 = vmatprep.subr.mxu0 0.0
    %741 = vmatpush1.msra.mxu0 0.0
    %742 = vmatprep.subr.mxu0 0.0
    %743 = vmatpush1.msra.mxu0 0.0
    %744 = vmatprep.subr.mxu0 0.0
    %745 = vmatpush1.msra.mxu0 0.0
    %746 = vmatprep.mubr.f32.mxu0 0.0
    %747 = vmatmul.mubr.f32.gmra.mrb[0].mxu0 %v680
    %v748 = vpop.f32.mrb[0].mxu0
    %v749 = vadd.f32 %v257, %v748
    %v750 = vpop.f32.mrb[0].mxu0
    %751 = vdwg.mxu0
    %v752 = vadd.f32 %v247, %v749
    %v753 = vxor.u32 %v752, 2147483648
    %v754 = vmul.f32 %v753, 1.442695
    %v755 = vpow.pop %v754
    %v756 = vadd.f32 %v755, 1.0
    %v757 = vrcp.pop %v756
    %v758 = vmul.f32 1.0, %v757
    %760 = vrot.lane.b32.xlu0 %v749, 64
    %v761 = vpop.permute.xlu0 %760
    %v763 = vmul.f32 %v758, %v761
    %765 = vrot.lane.b32.xlu0 %v763, 64
    %v766 = vpop.permute.xlu0 %765
    %v768 = vadd.f32 %v247, %v766
    %v769 = vtanh.pop %v768
    %v770 = vsub.f32 1.0, %v758
    %772 = vrot.lane.b32.xlu0 %v769, 96
    %v773 = vpop.permute.xlu0 %772
    %v775 = vmul.f32 %v770, %v773
    %v777 = vmul.f32 %v758, %v677
    %v778 = vadd.f32 %v775, %v777
    %780 = vrot.lane.b32.xlu0 %v778, 96
    %v781 = vpop.permute.xlu0 %780
    %v782 = vsel %vm259, %v781, 0
    %784 = vmatprep.subr.mxu0 0.0
    %785 = vmatpush1.msra.mxu0 %v248
    %786 = vmatprep.subr.mxu0 0.0
    %787 = vmatpush1.msra.mxu0 %v249
    %788 = vmatprep.subr.mxu0 0.0
    %789 = vmatpush1.msra.mxu0 %v250
    %790 = vmatprep.subr.mxu0 0.0
    %791 = vmatpush1.msra.mxu0 %v251
    %792 = vmatprep.subr.mxu0 0.0
    %793 = vmatpush1.msra.mxu0 0.0
    %794 = vmatprep.subr.mxu0 0.0
    %795 = vmatpush1.msra.mxu0 0.0
    %796 = vmatprep.subr.mxu0 0.0
    %797 = vmatpush1.msra.mxu0 0.0
    %798 = vmatprep.subr.mxu0 0.0
    %799 = vmatpush1.msra.mxu0 0.0
    %800 = vmatprep.subr.mxu0 0.0
    %801 = vmatpush1.msra.mxu0 0.0
    %802 = vmatprep.subr.mxu0 0.0
    %803 = vmatpush1.msra.mxu0 0.0
    %804 = vmatprep.subr.mxu0 0.0
    %805 = vmatpush1.msra.mxu0 0.0
    %806 = vmatprep.subr.mxu0 0.0
    %807 = vmatpush1.msra.mxu0 0.0
    %808 = vmatprep.subr.mxu0 0.0
    %809 = vmatpush1.msra.mxu0 0.0
    %810 = vmatprep.subr.mxu0 0.0
    %811 = vmatpush1.msra.mxu0 0.0
    %812 = vmatprep.subr.mxu0 0.0
    %813 = vmatpush1.msra.mxu0 0.0
    %814 = vmatprep.subr.mxu0 0.0
    %815 = vmatpush1.msra.mxu0 0.0
    %816 = vmatprep.subr.mxu0 0.0
    %817 = vmatpush1.msra.mxu0 0.0
    %818 = vmatprep.subr.mxu0 0.0
    %819 = vmatpush1.msra.mxu0 0.0
    %820 = vmatprep.subr.mxu0 0.0
    %821 = vmatpush1.msra.mxu0 0.0
    %822 = vmatprep.subr.mxu0 0.0
    %823 = vmatpush1.msra.mxu0 0.0
    %824 = vmatprep.subr.mxu0 0.0
    %825 = vmatpush1.msra.mxu0 0.0
    %826 = vmatprep.subr.mxu0 0.0
    %827 = vmatpush1.msra.mxu0 0.0
    %828 = vmatprep.subr.mxu0 0.0
    %829 = vmatpush1.msra.mxu0 0.0
    %830 = vmatprep.subr.mxu0 0.0
    %831 = vmatpush1.msra.mxu0 0.0
    %832 = vmatprep.subr.mxu0 0.0
    %833 = vmatpush1.msra.mxu0 0.0
    %834 = vmatprep.subr.mxu0 0.0
    %835 = vmatpush1.msra.mxu0 0.0
    %836 = vmatprep.subr.mxu0 0.0
    %837 = vmatpush1.msra.mxu0 0.0
    %838 = vmatprep.subr.mxu0 0.0
    %839 = vmatpush1.msra.mxu0 0.0
    %840 = vmatprep.subr.mxu0 0.0
    %841 = vmatpush1.msra.mxu0 0.0
    %842 = vmatprep.subr.mxu0 0.0
    %843 = vmatpush1.msra.mxu0 0.0
    %844 = vmatprep.subr.mxu0 0.0
    %845 = vmatpush1.msra.mxu0 0.0
    %846 = vmatprep.subr.mxu0 0.0
    %847 = vmatpush1.msra.mxu0 0.0
    %848 = vmatprep.mubr.f32.mxu0 0.0
    %849 = vmatmul.mubr.f32.gmra.mrb[0].mxu0 %v782
    %v850 = vpop.f32.mrb[0].mxu0
    %v851 = vadd.f32 %v257, %v850
    %v852 = vpop.f32.mrb[0].mxu0
    %853 = vdwg.mxu0
    %v855 = vrot.slane %v851, 6
    %v857 = vadd.f32 %v247, %v855
    %v858 = vxor.u32 %v857, 2147483648
    %v859 = vmul.f32 %v858, 1.442695
    %v860 = vpow.pop %v859
    %v861 = vadd.f32 %v860, 1.0
    %v862 = vrcp.pop %v861
    %v863 = vmul.f32 1.0, %v862
    %864 = vrot.lane.b32.xlu0 %v855, 64
    %v865 = vpop.permute.xlu0 %864
    %v867 = vmul.f32 %v863, %v865
    %869 = vrot.lane.b32.xlu0 %v867, 64
    %v870 = vpop.permute.xlu0 %869
    %v872 = vadd.f32 %v247, %v870
    %v873 = vtanh.pop %v872
    %v874 = vsub.f32 1.0, %v863
    %876 = vrot.lane.b32.xlu0 %v873, 96
    %v877 = vpop.permute.xlu0 %876
    %v879 = vmul.f32 %v874, %v877
    %v880 = vrot.slane %v778, 6
    %v882 = vmul.f32 %v863, %v880
    %v883 = vadd.f32 %v879, %v882
    %v885 = vrot.slane %v883, 2
    %886 = vrot.lane.b32.xlu0 %v885, 96
    %v887 = vpop.permute.xlu0 %886
    %v888 = vsel %vm259, %v887, 0
    %890 = vmatprep.subr.mxu0 0.0
    %891 = vmatpush1.msra.mxu0 %v248
    %892 = vmatprep.subr.mxu0 0.0
    %893 = vmatpush1.msra.mxu0 %v249
    %894 = vmatprep.subr.mxu0 0.0
    %895 = vmatpush1.msra.mxu0 %v250
    %896 = vmatprep.subr.mxu0 0.0
    %897 = vmatpush1.msra.mxu0 %v251
    %898 = vmatprep.subr.mxu0 0.0
    %899 = vmatpush1.msra.mxu0 0.0
    %900 = vmatprep.subr.mxu0 0.0
    %901 = vmatpush1.msra.mxu0 0.0
    %902 = vmatprep.subr.mxu0 0.0
    %903 = vmatpush1.msra.mxu0 0.0
    %904 = vmatprep.subr.mxu0 0.0
    %905 = vmatpush1.msra.mxu0 0.0
    %906 = vmatprep.subr.mxu0 0.0
    %907 = vmatpush1.msra.mxu0 0.0
    %908 = vmatprep.subr.mxu0 0.0
    %909 = vmatpush1.msra.mxu0 0.0
    %910 = vmatprep.subr.mxu0 0.0
    %911 = vmatpush1.msra.mxu0 0.0
    %912 = vmatprep.subr.mxu0 0.0
    %913 = vmatpush1.msra.mxu0 0.0
    %914 = vmatprep.subr.mxu0 0.0
    %915 = vmatpush1.msra.mxu0 0.0
    %916 = vmatprep.subr.mxu0 0.0
    %917 = vmatpush1.msra.mxu0 0.0
    %918 = vmatprep.subr.mxu0 0.0
    %919 = vmatpush1.msra.mxu0 0.0
    %920 = vmatprep.subr.mxu0 0.0
    %921 = vmatpush1.msra.mxu0 0.0
    %922 = vmatprep.subr.mxu0 0.0
    %923 = vmatpush1.msra.mxu0 0.0
    %924 = vmatprep.subr.mxu0 0.0
    %925 = vmatpush1.msra.mxu0 0.0
    %926 = vmatprep.subr.mxu0 0.0
    %927 = vmatpush1.msra.mxu0 0.0
    %928 = vmatprep.subr.mxu0 0.0
    %929 = vmatpush1.msra.mxu0 0.0
    %930 = vmatprep.subr.mxu0 0.0
    %931 = vmatpush1.msra.mxu0 0.0
    %932 = vmatprep.subr.mxu0 0.0
    %933 = vmatpush1.msra.mxu0 0.0
    %934 = vmatprep.subr.mxu0 0.0
    %935 = vmatpush1.msra.mxu0 0.0
    %936 = vmatprep.subr.mxu0 0.0
    %937 = vmatpush1.msra.mxu0 0.0
    %938 = vmatprep.subr.mxu0 0.0
    %939 = vmatpush1.msra.mxu0 0.0
    %940 = vmatprep.subr.mxu0 0.0
    %941 = vmatpush1.msra.mxu0 0.0
    %942 = vmatprep.subr.mxu0 0.0
    %943 = vmatpush1.msra.mxu0 0.0
    %944 = vmatprep.subr.mxu0 0.0
    %945 = vmatpush1.msra.mxu0 0.0
    %946 = vmatprep.subr.mxu0 0.0
    %947 = vmatpush1.msra.mxu0 0.0
    %948 = vmatprep.subr.mxu0 0.0
    %949 = vmatpush1.msra.mxu0 0.0
    %950 = vmatprep.subr.mxu0 0.0
    %951 = vmatpush1.msra.mxu0 0.0
    %952 = vmatprep.subr.mxu0 0.0
    %953 = vmatpush1.msra.mxu0 0.0
    %954 = vmatprep.mubr.f32.mxu0 0.0
    %955 = vmatmul.mubr.f32.gmra.mrb[0].mxu0 %v888
    %v956 = vpop.f32.mrb[0].mxu0
    %v957 = vadd.f32 %v257, %v956
    %v958 = vpop.f32.mrb[0].mxu0
    %959 = vdwg.mxu0
    %v961 = vrot.slane %v957, 4
    %v963 = vadd.f32 %v247, %v961
    %v964 = vxor.u32 %v963, 2147483648
    %v965 = vmul.f32 %v964, 1.442695
    %v966 = vpow.pop %v965
    %v967 = vadd.f32 %v966, 1.0
    %v968 = vrcp.pop %v967
    %v969 = vmul.f32 1.0, %v968
    %970 = vrot.lane.b32.xlu0 %v961, 64
    %v971 = vpop.permute.xlu0 %970
    %v973 = vmul.f32 %v969, %v971
    %975 = vrot.lane.b32.xlu0 %v973, 64
    %v976 = vpop.permute.xlu0 %975
    %v978 = vadd.f32 %v247, %v976
    %v979 = vtanh.pop %v978
    %v980 = vsub.f32 1.0, %v969
    %982 = vrot.lane.b32.xlu0 %v979, 96
    %v983 = vpop.permute.xlu0 %982
    %v985 = vmul.f32 %v980, %v983
    %v986 = vrot.slane %v883, 6
    %v988 = vmul.f32 %v969, %v986
    %v989 = vadd.f32 %v985, %v988
    %v991 = vrot.slane %v989, 4
    %992 = vrot.lane.b32.xlu0 %v991, 96
    %v993 = vpop.permute.xlu0 %992
    %v994 = vsel %vm259, %v993, 0
    %996 = vmatprep.subr.mxu0 0.0
    %997 = vmatpush1.msra.mxu0 %v248
    %998 = vmatprep.subr.mxu0 0.0
    %999 = vmatpush1.msra.mxu0 %v249
    %1000 = vmatprep.subr.mxu0 0.0
    %1001 = vmatpush1.msra.mxu0 %v250
    %1002 = vmatprep.subr.mxu0 0.0
    %1003 = vmatpush1.msra.mxu0 %v251
    %1004 = vmatprep.subr.mxu0 0.0
    %1005 = vmatpush1.msra.mxu0 0.0
    %1006 = vmatprep.subr.mxu0 0.0
    %1007 = vmatpush1.msra.mxu0 0.0
    %1008 = vmatprep.subr.mxu0 0.0
    %1009 = vmatpush1.msra.mxu0 0.0
    %1010 = vmatprep.subr.mxu0 0.0
    %1011 = vmatpush1.msra.mxu0 0.0
    %1012 = vmatprep.subr.mxu0 0.0
    %1013 = vmatpush1.msra.mxu0 0.0
    %1014 = vmatprep.subr.mxu0 0.0
    %1015 = vmatpush1.msra.mxu0 0.0
    %1016 = vmatprep.subr.mxu0 0.0
    %1017 = vmatpush1.msra.mxu0 0.0
    %1018 = vmatprep.subr.mxu0 0.0
    %1019 = vmatpush1.msra.mxu0 0.0
    %1020 = vmatprep.subr.mxu0 0.0
    %1021 = vmatpush1.msra.mxu0 0.0
    %1022 = vmatprep.subr.mxu0 0.0
    %1023 = vmatpush1.msra.mxu0 0.0
    %1024 = vmatprep.subr.mxu0 0.0
    %1025 = vmatpush1.msra.mxu0 0.0
    %1026 = vmatprep.subr.mxu0 0.0
    %1027 = vmatpush1.msra.mxu0 0.0
    %1028 = vmatprep.subr.mxu0 0.0
    %1029 = vmatpush1.msra.mxu0 0.0
    %1030 = vmatprep.subr.mxu0 0.0
    %1031 = vmatpush1.msra.mxu0 0.0
    %1032 = vmatprep.subr.mxu0 0.0
    %1033 = vmatpush1.msra.mxu0 0.0
    %1034 = vmatprep.subr.mxu0 0.0
    %1035 = vmatpush1.msra.mxu0 0.0
    %1036 = vmatprep.subr.mxu0 0.0
    %1037 = vmatpush1.msra.mxu0 0.0
    %1038 = vmatprep.subr.mxu0 0.0
    %1039 = vmatpush1.msra.mxu0 0.0
    %1040 = vmatprep.subr.mxu0 0.0
    %1041 = vmatpush1.msra.mxu0 0.0
    %1042 = vmatprep.subr.mxu0 0.0
    %1043 = vmatpush1.msra.mxu0 0.0
    %1044 = vmatprep.subr.mxu0 0.0
    %1045 = vmatpush1.msra.mxu0 0.0
    %1046 = vmatprep.subr.mxu0 0.0
    %1047 = vmatpush1.msra.mxu0 0.0
    %1048 = vmatprep.subr.mxu0 0.0
    %1049 = vmatpush1.msra.mxu0 0.0
    %1050 = vmatprep.subr.mxu0 0.0
    %1051 = vmatpush1.msra.mxu0 0.0
    %1052 = vmatprep.subr.mxu0 0.0
    %1053 = vmatpush1.msra.mxu0 0.0
    %1054 = vmatprep.subr.mxu0 0.0
    %1055 = vmatpush1.msra.mxu0 0.0
    %1056 = vmatprep.subr.mxu0 0.0
    %1057 = vmatpush1.msra.mxu0 0.0
    %1058 = vmatprep.subr.mxu0 0.0
    %1059 = vmatpush1.msra.mxu0 0.0
    %1060 = vmatprep.mubr.f32.mxu0 0.0
    %1061 = vmatmul.mubr.f32.gmra.mrb[0].mxu0 %v994
    %v1062 = vpop.f32.mrb[0].mxu0
    %v1063 = vadd.f32 %v257, %v1062
    %v1064 = vpop.f32.mrb[0].mxu0
    %1065 = vdwg.mxu0
    %v1067 = vrot.slane %v1063, 2
    %v1069 = vadd.f32 %v247, %v1067
    %v1070 = vxor.u32 %v1069, 2147483648
    %v1071 = vmul.f32 %v1070, 1.442695
    %v1072 = vpow.pop %v1071
    %v1073 = vadd.f32 %v1072, 1.0
    %v1074 = vrcp.pop %v1073
    %v1075 = vmul.f32 1.0, %v1074
    %1076 = vrot.lane.b32.xlu0 %v1067, 64
    %v1077 = vpop.permute.xlu0 %1076
    %v1079 = vmul.f32 %v1075, %v1077
    %1081 = vrot.lane.b32.xlu0 %v1079, 64
    %v1082 = vpop.permute.xlu0 %1081
    %v1084 = vadd.f32 %v247, %v1082
    %v1085 = vtanh.pop %v1084
    %v1086 = vsub.f32 1.0, %v1075
    %1088 = vrot.lane.b32.xlu0 %v1085, 96
    %v1089 = vpop.permute.xlu0 %1088
    %v1091 = vmul.f32 %v1086, %v1089
    %v1092 = vrot.slane %v989, 6
    %v1094 = vmul.f32 %v1075, %v1092
    %v1095 = vadd.f32 %v1091, %v1094
    %1097 = vrot.lane.b32.xlu0 %v1095, 96
    %v1098 = vpop.permute.xlu0 %1097
    %vm1100 = vcmask 261126
    %1101 = vst.msk [vmem:[#allocation2 - $0x6] sm:$0xc0] %vm1100, %v1098
    // Predicated region
    $region30: #{rnn_observation_embedding.1} parent=1 // pred_check
      _
    $region31: #{rnn_observation_embedding.1} parent=1 // pred_check_branch
      %1103 = sbr.rel (0) target = $region33
    $region32: #{rnn_observation_embedding.1} parent=1 // pred_region
      %s1105 = ssub.s32 32, 32
      %1106 = vsyncadd [#allocation3], %s1105
      %s1108 = sshll.u32 [#allocation2], 4
      %s1109 = int_to_ptr.vmem [resolvable:$true] %s1108
      %1111 = dma.vmem_to_hbm [thread:$0]  %s1109, 32, %s7, [#allocation3]
    $region33: #{rnn_observation_embedding.1} parent=1 // pred_fallthru
      _
    // Predicated region
    $region34: #{rnn_observation_embedding.1} parent=1 // pred_check
      _
    $region35: #{rnn_observation_embedding.1} parent=1 // pred_check_branch
      %1113 = sbr.rel (0) target = $region37
    $region36: #{rnn_observation_embedding.1} parent=1 // pred_region
      %1114 = dma.done [#allocation3], 32
    $region37: #{rnn_observation_embedding.1} parent=1 // pred_fallthru
      _
    %1115 = vsyncpa [#allocation3], 1

</llo_original>
